<compile_context>
chip_gen: v6e
topology: v6e:2x2x1
jax: 0.10.0
libtpu: 0.0.40
codegen_flags: <defaults>
</compile_context>

<pallas_src>
import jax
import jax.numpy as jnp
from jax.experimental import pallas as pl
from jax.experimental.pallas import tpu as pltpu

COMPUTE_DTYPE = jnp.bfloat16  # MXU operand dtype; accumulation is always f32.


# ----------------------------------------------------------------------------- #
# Pallas kernel: one batch tile (TILE_B rows) of the full head.
# ----------------------------------------------------------------------------- #
def _head_kernel(
    x_ref,              # [TILE_B, T, D]   input dtype (f32 or bf16)
    wa1_ref, ba1_ref,   # [D, A] bf16, [1, A] f32
    wa2_ref,            # [1, A] f32 (attention score vector, VPU operand)
    w1_ref, b1_ref,     # [D, 256] bf16 (BN1 folded), [1, 256] f32
    w2_ref, b2_ref,     # [256, 128] bf16 (BN2 folded), [1, 128] f32
    w3_ref, b3_ref,     # [128, C_pad] bf16, [1, C_pad] f32
    out_ref,            # [TILE_B, C_pad] f32
):
    T = x_ref.shape[1]
    mx_dtype = wa1_ref.dtype

    wa1 = wa1_ref[...]
    ba1 = ba1_ref[...]
    wa2 = wa2_ref[...]

    # ---- AttentionPooling: one timestep at a time (T is small and static).
    # Bounds live intermediates to [TILE_B, A] and avoids any reshapes.
    x_t_list = []
    s_list = []
    for t in range(T):
        x_t = x_ref[:, t, :]                                        # [TB, D]
        h_t = jnp.tanh(
            jnp.dot(x_t.astype(mx_dtype), wa1,
                    preferred_element_type=jnp.float32) + ba1)      # f32 [TB, A]
        # Second attention Linear (A->1) as VPU multiply + lane reduce.
        # Its bias ba2 is a per-timestep constant and cancels under softmax.
        s_t = jnp.sum(h_t * wa2, axis=-1, keepdims=True)            # f32 [TB, 1]
        x_t_list.append(x_t)
        s_list.append(s_t)

    # Softmax over timesteps (dim=1 of the original [B, T, D] input).
    m = s_list[0]
    for t in range(1, T):
        m = jnp.maximum(m, s_list[t])
    e_list = [jnp.exp(s - m) for s in s_list]
    denom = e_list[0]
    for t in range(1, T):
        denom = denom + e_list[t]
    inv_denom = pl.reciprocal(denom, approx=True)                    # EUP slot

    # pooled[b] = sum_t softmax(s)[b, t] * x[b, t]  — weights normalized in f32
    # before touching x; VPU multiply-accumulate, no quadratic MXU waste.
    pooled = x_t_list[0].astype(jnp.float32) * (e_list[0] * inv_denom)
    for t in range(1, T):
        pooled = pooled + x_t_list[t].astype(jnp.float32) * (e_list[t] * inv_denom)

    # ---- Classifier (eval-mode BatchNorm folded into w/b; Dropout = identity).
    z1 = jnp.dot(pooled.astype(mx_dtype), w1_ref[...],
                 preferred_element_type=jnp.float32) + b1_ref[...]
    z1 = jnp.maximum(z1, 0.0)

    z2 = jnp.dot(z1.astype(mx_dtype), w2_ref[...],
                 preferred_element_type=jnp.float32) + b2_ref[...]
    z2 = jnp.maximum(z2, 0.0)

    z3 = jnp.dot(z2.astype(mx_dtype), w3_ref[...],
                 preferred_element_type=jnp.float32) + b3_ref[...]
    out_ref[...] = z3.astype(out_ref.dtype)                          # lane-dense store


# ----------------------------------------------------------------------------- #
# Wrapper helpers.
# ----------------------------------------------------------------------------- #
def _cdiv(a, b):
    return -(-a // b)


def _round_up(n, m):
    return _cdiv(n, m) * m


def _vmem_capacity_bytes():
    try:
        cap = getattr(pltpu.get_tpu_info(), "vmem_capacity_bytes", None)
        if cap:
            return int(cap)
    except Exception:
        pass
    return 64 * 1024 * 1024  # conservative (v7x-sized) default


def _choose_tiling(B, T, D, A, C_pad, x_itemsize, budget_bytes):
    """Batch tile targeting 2048-4096 MXU rows per grid step, bounded by a
    per-generation VMEM budget.  Keeps >= 2 (even) grid steps when the batch
    allows so dimension_semantics=("parallel",) can split across v7x's 2 TCs."""
    b_ceil = _round_up(B, 8)
    t_sub = _round_up(T, 8)  # sublane padding of the (T, D) trailing tile in VMEM

    def footprint(tb):
        return (2 * tb * t_sub * D * x_itemsize             # x block, double-buffered
                + 2 * tb * C_pad * 4                        # out block, double-buffered
                + tb * T * D * 4                            # per-timestep x_t slices
                + tb * (A + D + 256 + 128 + C_pad) * 4      # h_t / pooled / z1 / z2 / z3
                + 2 * ((D * A + D * 256 + 256 * 128 + 128 * C_pad) * 2
                       + (A + 256 + 128 + C_pad) * 4))      # resident weights + biases

    max_rows = 4096
    tile = 8
    while (tile * 2 <= b_ceil and tile * 2 * T <= max_rows
           and footprint(tile * 2) <= budget_bytes):
        tile *= 2

    n_steps = _cdiv(b_ceil, tile)
    if b_ceil >= 16:                 # enough batch to feed both v7x TensorCores
        n_steps = max(n_steps, 2)
        if n_steps % 2:
            n_steps += 1
    tile_b = _round_up(_cdiv(b_ceil, n_steps), 8)
    b_pad = tile_b * n_steps
    return tile_b, n_steps, b_pad


# ----------------------------------------------------------------------------- #
# Wrapper: BN folding, (minimal) padding, grid + BlockSpecs.
# ----------------------------------------------------------------------------- #
@jax.jit
def crop_classification_head(x, params):
    B, T, D = x.shape
    A = params["wa1"].shape[1]
    C = params["w3"].shape[1]
    C_pad = _round_up(C, 128)        # lane-dense (unmasked) output stores

    # Fold eval-mode BatchNorm1d into the preceding Linear (tiny tensors).
    eps = 1e-5
    s1 = params["bn1_gamma"] * jax.lax.rsqrt(params["bn1_var"] + eps)
    s2 = params["bn2_gamma"] * jax.lax.rsqrt(params["bn2_var"] + eps)
    w1f = params["w1"] * s1
    b1f = params["b1"] * s1 + (params["bn1_beta"] - params["bn1_mean"] * s1)
    w2f = params["w2"] * s2
    b2f = params["b2"] * s2 + (params["bn2_beta"] - params["bn2_mean"] * s2)

    vmem_cap = _vmem_capacity_bytes()
    vmem_limit = int(min(vmem_cap * 3 // 4, 96 * 1024 * 1024))   # ~48 MiB v7x, ~96 MiB v5e/v6e
    budget = vmem_limit // 2
    tile_b, n_steps, B_pad = _choose_tiling(B, T, D, A, C_pad,
                                            x.dtype.itemsize, budget)

    # x is streamed in its original dtype and [B, T, D] layout — no feature
    # padding, no reshape, no wrapper-side cast copy (the kernel casts per-tile).
    # Only the batch dim is zero-padded up to the tile grid (no-op if aligned).
    if B_pad != B:
        x = jnp.pad(x, ((0, B_pad - B), (0, 0), (0, 0)))

    wa1 = params["wa1"].astype(COMPUTE_DTYPE)                    # [D, A]
    ba1 = params["ba1"].astype(jnp.float32)                      # [1, A]
    wa2 = params["wa2"].T.astype(jnp.float32)                    # [1, A] row, VPU operand
    # params["ba2"] is intentionally unused: constant score offsets cancel in softmax.
    w1 = w1f.astype(COMPUTE_DTYPE)
    b1 = b1f.astype(jnp.float32)
    w2 = w2f.astype(COMPUTE_DTYPE)
    b2 = b2f.astype(jnp.float32)
    w3 = jnp.pad(params["w3"], ((0, 0), (0, C_pad - C))).astype(COMPUTE_DTYPE)
    b3 = jnp.pad(params["b3"], ((0, 0), (0, C_pad - C))).astype(jnp.float32)

    def const_spec(shape):
        zeros = (0,) * len(shape)
        return pl.BlockSpec(shape, lambda i, _z=zeros: _z)

    flops = (2 * B_pad * T * D * A                 # attention hidden matmuls
             + 3 * B_pad * T * A                   # score multiply + lane reduce
             + 3 * B_pad * T * D                   # pooling multiply-accumulate
             + 2 * B_pad * (D * 256 + 256 * 128 + 128 * C_pad))
    transcendentals = B_pad * T * A + B_pad * T + B_pad
    bytes_accessed = (x.size * x.dtype.itemsize + B_pad * C_pad * 4
                      + sum(a.size * a.dtype.itemsize
                            for a in (wa1, ba1, wa2, w1, b1, w2, b2, w3, b3)))

    out = pl.pallas_call(
        _head_kernel,
        out_shape=jax.ShapeDtypeStruct((B_pad, C_pad), jnp.float32),
        grid=(n_steps,),
        in_specs=[
            # x: the only streamed operand (auto double-buffered).  If exposed DMA
            # shows up in traces, try pipeline_mode=pl.Buffered(3) on this spec only.
            pl.BlockSpec((tile_b, T, D), lambda i: (i, 0, 0)),
            const_spec((D, A)), const_spec((1, A)),              # wa1, ba1
            const_spec((1, A)),                                  # wa2 row
            const_spec((D, 256)), const_spec((1, 256)),          # w1 (+BN1), b1
            const_spec((256, 128)), const_spec((1, 128)),        # w2 (+BN2), b2
            const_spec((128, C_pad)), const_spec((1, C_pad)),    # w3, b3
        ],
        out_specs=pl.BlockSpec((tile_b, C_pad), lambda i: (i, 0)),
        compiler_params=pltpu.CompilerParams(
            dimension_semantics=("parallel",),
            vmem_limit_bytes=vmem_limit,
        ),
        cost_estimate=pl.CostEstimate(
            flops=int(flops),
            transcendentals=int(transcendentals),
            bytes_accessed=int(bytes_accessed),
        ),
    )(x, wa1, ba1, wa2, w1, b1, w2, b2, w3, b3)

    return out[:B, :C]


# ----------------------------------------------------------------------------- #
# Pure-JAX f32 reference (mirrors the PyTorch module in eval mode).
# ----------------------------------------------------------------------------- #
def reference_forward(x, params):
    eps = 1e-5
    h = jnp.tanh(x @ params["wa1"] + params["ba1"])
    s = (h @ params["wa2"] + params["ba2"])[..., 0]
    a = jax.nn.softmax(s, axis=1)
    pooled = jnp.sum(x * a[:, :, None], axis=1)

    z1 = pooled @ params["w1"] + params["b1"]
    z1 = (z1 - params["bn1_mean"]) / jnp.sqrt(params["bn1_var"] + eps)
    z1 = jnp.maximum(z1 * params["bn1_gamma"] + params["bn1_beta"], 0.0)

    z2 = z1 @ params["w2"] + params["b2"]
    z2 = (z2 - params["bn2_mean"]) / jnp.sqrt(params["bn2_var"] + eps)
    z2 = jnp.maximum(z2 * params["bn2_gamma"] + params["bn2_beta"], 0.0)

    return z2 @ params["w3"] + params["b3"]


def init_params(key, input_dim, num_classes=3, att_hidden=64):
    ks = jax.random.split(key, 16)

    def lin(k, fan_in, fan_out):
        return jax.random.normal(k, (fan_in, fan_out), jnp.float32) * (1.0 / jnp.sqrt(fan_in))

    kw = iter(ks)
    params = {
        "wa1": lin(next(kw), input_dim, att_hidden),
        "ba1": jax.random.normal(next(kw), (1, att_hidden), jnp.float32) * 0.01,
        "wa2": lin(next(kw), att_hidden, 1),
        "ba2": jax.random.normal(next(kw), (1, 1), jnp.float32) * 0.01,
        "w1": lin(next(kw), input_dim, 256),
        "b1": jax.random.normal(next(kw), (1, 256), jnp.float32) * 0.01,
        "w2": lin(next(kw), 256, 128),
        "b2": jax.random.normal(next(kw), (1, 128), jnp.float32) * 0.01,
        "w3": lin(next(kw), 128, num_classes),
        "b3": jax.random.normal(next(kw), (1, num_classes), jnp.float32) * 0.01,
        # BatchNorm parameters / running stats (eval mode)
        "bn1_gamma": 1.0 + 0.1 * jax.random.normal(next(kw), (1, 256), jnp.float32),
        "bn1_beta": 0.1 * jax.random.normal(next(kw), (1, 256), jnp.float32),
        "bn1_mean": 0.05 * jax.random.normal(next(kw), (1, 256), jnp.float32),
        "bn1_var": jnp.abs(1.0 + 0.1 * jax.random.normal(next(kw), (1, 256), jnp.float32)),
        "bn2_gamma": jnp.ones((1, 128), jnp.float32),
        "bn2_beta": jnp.zeros((1, 128), jnp.float32),
        "bn2_mean": jnp.zeros((1, 128), jnp.float32),
        "bn2_var": jnp.ones((1, 128), jnp.float32)
                   + 0.05 * jax.random.normal(next(kw), (1, 128), jnp.float32) ** 2,
    }
    return params


if __name__ == "__main__":
    key = jax.random.PRNGKey(0)
    k_x, k_p = jax.random.split(key)

    B, T, D = 2, 8, 32          # batch, timesteps, encoder feature dim (small demo)
    NUM_CLASSES = 3

    x = jax.random.normal(k_x, (B, T, D), jnp.float32)
    params = init_params(k_p, D, NUM_CLASSES)

    out = crop_classification_head(x, params)
    out = jax.block_until_ready(out)

    ref = reference_forward(x, params)
    assert out.shape == (B, NUM_CLASSES)
    # bf16 MXU operands (f32 accumulation) + approx softmax reciprocal ->
    # compare against the f32 reference with a bf16-appropriate tolerance.
    assert jnp.allclose(out, ref, atol=5e-2, rtol=5e-2), (out, ref)

    print("KERNEL_OK")
</pallas_src>

<mosaic_0001>
module attributes {stable_mosaic.version = 11 : i64} {
  func.func @_head_kernel(%arg0: i32, %arg1: memref<8x8x32xf32, #tpu.memory_space<vmem>>, %arg2: memref<32x64xbf16, #tpu.memory_space<vmem>>, %arg3: memref<1x64xf32, #tpu.memory_space<vmem>>, %arg4: memref<1x64xf32, #tpu.memory_space<vmem>>, %arg5: memref<32x256xbf16, #tpu.memory_space<vmem>>, %arg6: memref<1x256xf32, #tpu.memory_space<vmem>>, %arg7: memref<256x128xbf16, #tpu.memory_space<vmem>>, %arg8: memref<1x128xf32, #tpu.memory_space<vmem>>, %arg9: memref<128x128xbf16, #tpu.memory_space<vmem>>, %arg10: memref<1x128xf32, #tpu.memory_space<vmem>>, %arg11: memref<8x128xf32, #tpu.memory_space<vmem>>) attributes {dimension_semantics = [#tpu.dimension_semantics<parallel>], iteration_bounds = array<i64: 1>, scalar_prefetch = 0 : i64, scratch_operands = 0 : i64, tpu.core_type = #tpu.core_type<tc>, window_params = [{transform_indices = @transform_0, window_bounds = array<i64: 8, 8, 32>}, {pipeline_mode = #tpu.pipeline_mode<synchronous>, transform_indices = @transform_1, window_bounds = array<i64: 32, 64>}, {pipeline_mode = #tpu.pipeline_mode<synchronous>, transform_indices = @transform_2, window_bounds = array<i64: 1, 64>}, {pipeline_mode = #tpu.pipeline_mode<synchronous>, transform_indices = @transform_3, window_bounds = array<i64: 1, 64>}, {pipeline_mode = #tpu.pipeline_mode<synchronous>, transform_indices = @transform_4, window_bounds = array<i64: 32, 256>}, {pipeline_mode = #tpu.pipeline_mode<synchronous>, transform_indices = @transform_5, window_bounds = array<i64: 1, 256>}, {pipeline_mode = #tpu.pipeline_mode<synchronous>, transform_indices = @transform_6, window_bounds = array<i64: 256, 128>}, {pipeline_mode = #tpu.pipeline_mode<synchronous>, transform_indices = @transform_7, window_bounds = array<i64: 1, 128>}, {pipeline_mode = #tpu.pipeline_mode<synchronous>, transform_indices = @transform_8, window_bounds = array<i64: 128, 128>}, {pipeline_mode = #tpu.pipeline_mode<synchronous>, transform_indices = @transform_9, window_bounds = array<i64: 1, 128>}, {transform_indices = @transform_10, window_bounds = array<i64: 8, 128>}]} {
    %c0 = arith.constant 0 : index
    %c0_0 = arith.constant 0 : index
    %0 = vector.load %arg2[%c0, %c0_0] : memref<32x64xbf16, #tpu.memory_space<vmem>>, vector<32x64xbf16>
    %c0_1 = arith.constant 0 : index
    %c0_2 = arith.constant 0 : index
    %1 = vector.load %arg3[%c0_1, %c0_2] : memref<1x64xf32, #tpu.memory_space<vmem>>, vector<1x64xf32>
    %c0_3 = arith.constant 0 : index
    %c0_4 = arith.constant 0 : index
    %2 = vector.load %arg4[%c0_3, %c0_4] : memref<1x64xf32, #tpu.memory_space<vmem>>, vector<1x64xf32>
    %c0_5 = arith.constant 0 : index
    %c0_6 = arith.constant 0 : index
    %c0_7 = arith.constant 0 : index
    %3 = vector.load %arg1[%c0_5, %c0_6, %c0_7] : memref<8x8x32xf32, #tpu.memory_space<vmem>>, vector<8x1x32xf32>
    %4 = vector.shape_cast %3 : vector<8x1x32xf32> to vector<8x32xf32>
    %5 = arith.truncf %4 : vector<8x32xf32> to vector<8x32xbf16>
    %cst = arith.constant dense<0.000000e+00> : vector<8x64xf32>
    %6 = tpu.matmul %5, %0, %cst {dimension_numbers = #tpu.dot_dimension_numbers<[1], [0], [0], [1], [0, 0, 1, 1], [], []>} : vector<8x32xbf16>, vector<32x64xbf16>, vector<8x64xf32> -> vector<8x64xf32>
    %7 = vector.broadcast %1 : vector<1x64xf32> to vector<8x64xf32>
    %8 = arith.addf %6, %7 : vector<8x64xf32>
    %9 = math.tanh %8 : vector<8x64xf32>
    %10 = vector.broadcast %2 : vector<1x64xf32> to vector<8x64xf32>
    %11 = arith.mulf %9, %10 : vector<8x64xf32>
    %cst_8 = arith.constant dense<0.000000e+00> : vector<8xf32>
    %12 = vector.multi_reduction <add>, %11, %cst_8 [1] : vector<8x64xf32> to vector<8xf32>
    %13 = vector.shape_cast %12 : vector<8xf32> to vector<8x1xf32>
    %c0_9 = arith.constant 0 : index
    %c1 = arith.constant 1 : index
    %c0_10 = arith.constant 0 : index
    %14 = vector.load %arg1[%c0_9, %c1, %c0_10] : memref<8x8x32xf32, #tpu.memory_space<vmem>>, vector<8x1x32xf32>
    %15 = vector.shape_cast %14 : vector<8x1x32xf32> to vector<8x32xf32>
    %16 = arith.truncf %15 : vector<8x32xf32> to vector<8x32xbf16>
    %cst_11 = arith.constant dense<0.000000e+00> : vector<8x64xf32>
    %17 = tpu.matmul %16, %0, %cst_11 {dimension_numbers = #tpu.dot_dimension_numbers<[1], [0], [0], [1], [0, 0, 1, 1], [], []>} : vector<8x32xbf16>, vector<32x64xbf16>, vector<8x64xf32> -> vector<8x64xf32>
    %18 = vector.broadcast %1 : vector<1x64xf32> to vector<8x64xf32>
    %19 = arith.addf %17, %18 : vector<8x64xf32>
    %20 = math.tanh %19 : vector<8x64xf32>
    %21 = vector.broadcast %2 : vector<1x64xf32> to vector<8x64xf32>
    %22 = arith.mulf %20, %21 : vector<8x64xf32>
    %cst_12 = arith.constant dense<0.000000e+00> : vector<8xf32>
    %23 = vector.multi_reduction <add>, %22, %cst_12 [1] : vector<8x64xf32> to vector<8xf32>
    %24 = vector.shape_cast %23 : vector<8xf32> to vector<8x1xf32>
    %c0_13 = arith.constant 0 : index
    %c2 = arith.constant 2 : index
    %c0_14 = arith.constant 0 : index
    %25 = vector.load %arg1[%c0_13, %c2, %c0_14] : memref<8x8x32xf32, #tpu.memory_space<vmem>>, vector<8x1x32xf32>
    %26 = vector.shape_cast %25 : vector<8x1x32xf32> to vector<8x32xf32>
    %27 = arith.truncf %26 : vector<8x32xf32> to vector<8x32xbf16>
    %cst_15 = arith.constant dense<0.000000e+00> : vector<8x64xf32>
    %28 = tpu.matmul %27, %0, %cst_15 {dimension_numbers = #tpu.dot_dimension_numbers<[1], [0], [0], [1], [0, 0, 1, 1], [], []>} : vector<8x32xbf16>, vector<32x64xbf16>, vector<8x64xf32> -> vector<8x64xf32>
    %29 = vector.broadcast %1 : vector<1x64xf32> to vector<8x64xf32>
    %30 = arith.addf %28, %29 : vector<8x64xf32>
    %31 = math.tanh %30 : vector<8x64xf32>
    %32 = vector.broadcast %2 : vector<1x64xf32> to vector<8x64xf32>
    %33 = arith.mulf %31, %32 : vector<8x64xf32>
    %cst_16 = arith.constant dense<0.000000e+00> : vector<8xf32>
    %34 = vector.multi_reduction <add>, %33, %cst_16 [1] : vector<8x64xf32> to vector<8xf32>
    %35 = vector.shape_cast %34 : vector<8xf32> to vector<8x1xf32>
    %c0_17 = arith.constant 0 : index
    %c3 = arith.constant 3 : index
    %c0_18 = arith.constant 0 : index
    %36 = vector.load %arg1[%c0_17, %c3, %c0_18] : memref<8x8x32xf32, #tpu.memory_space<vmem>>, vector<8x1x32xf32>
    %37 = vector.shape_cast %36 : vector<8x1x32xf32> to vector<8x32xf32>
    %38 = arith.truncf %37 : vector<8x32xf32> to vector<8x32xbf16>
    %cst_19 = arith.constant dense<0.000000e+00> : vector<8x64xf32>
    %39 = tpu.matmul %38, %0, %cst_19 {dimension_numbers = #tpu.dot_dimension_numbers<[1], [0], [0], [1], [0, 0, 1, 1], [], []>} : vector<8x32xbf16>, vector<32x64xbf16>, vector<8x64xf32> -> vector<8x64xf32>
    %40 = vector.broadcast %1 : vector<1x64xf32> to vector<8x64xf32>
    %41 = arith.addf %39, %40 : vector<8x64xf32>
    %42 = math.tanh %41 : vector<8x64xf32>
    %43 = vector.broadcast %2 : vector<1x64xf32> to vector<8x64xf32>
    %44 = arith.mulf %42, %43 : vector<8x64xf32>
    %cst_20 = arith.constant dense<0.000000e+00> : vector<8xf32>
    %45 = vector.multi_reduction <add>, %44, %cst_20 [1] : vector<8x64xf32> to vector<8xf32>
    %46 = vector.shape_cast %45 : vector<8xf32> to vector<8x1xf32>
    %c0_21 = arith.constant 0 : index
    %c4 = arith.constant 4 : index
    %c0_22 = arith.constant 0 : index
    %47 = vector.load %arg1[%c0_21, %c4, %c0_22] : memref<8x8x32xf32, #tpu.memory_space<vmem>>, vector<8x1x32xf32>
    %48 = vector.shape_cast %47 : vector<8x1x32xf32> to vector<8x32xf32>
    %49 = arith.truncf %48 : vector<8x32xf32> to vector<8x32xbf16>
    %cst_23 = arith.constant dense<0.000000e+00> : vector<8x64xf32>
    %50 = tpu.matmul %49, %0, %cst_23 {dimension_numbers = #tpu.dot_dimension_numbers<[1], [0], [0], [1], [0, 0, 1, 1], [], []>} : vector<8x32xbf16>, vector<32x64xbf16>, vector<8x64xf32> -> vector<8x64xf32>
    %51 = vector.broadcast %1 : vector<1x64xf32> to vector<8x64xf32>
    %52 = arith.addf %50, %51 : vector<8x64xf32>
    %53 = math.tanh %52 : vector<8x64xf32>
    %54 = vector.broadcast %2 : vector<1x64xf32> to vector<8x64xf32>
    %55 = arith.mulf %53, %54 : vector<8x64xf32>
    %cst_24 = arith.constant dense<0.000000e+00> : vector<8xf32>
    %56 = vector.multi_reduction <add>, %55, %cst_24 [1] : vector<8x64xf32> to vector<8xf32>
    %57 = vector.shape_cast %56 : vector<8xf32> to vector<8x1xf32>
    %c0_25 = arith.constant 0 : index
    %c5 = arith.constant 5 : index
    %c0_26 = arith.constant 0 : index
    %58 = vector.load %arg1[%c0_25, %c5, %c0_26] : memref<8x8x32xf32, #tpu.memory_space<vmem>>, vector<8x1x32xf32>
    %59 = vector.shape_cast %58 : vector<8x1x32xf32> to vector<8x32xf32>
    %60 = arith.truncf %59 : vector<8x32xf32> to vector<8x32xbf16>
    %cst_27 = arith.constant dense<0.000000e+00> : vector<8x64xf32>
    %61 = tpu.matmul %60, %0, %cst_27 {dimension_numbers = #tpu.dot_dimension_numbers<[1], [0], [0], [1], [0, 0, 1, 1], [], []>} : vector<8x32xbf16>, vector<32x64xbf16>, vector<8x64xf32> -> vector<8x64xf32>
    %62 = vector.broadcast %1 : vector<1x64xf32> to vector<8x64xf32>
    %63 = arith.addf %61, %62 : vector<8x64xf32>
    %64 = math.tanh %63 : vector<8x64xf32>
    %65 = vector.broadcast %2 : vector<1x64xf32> to vector<8x64xf32>
    %66 = arith.mulf %64, %65 : vector<8x64xf32>
    %cst_28 = arith.constant dense<0.000000e+00> : vector<8xf32>
    %67 = vector.multi_reduction <add>, %66, %cst_28 [1] : vector<8x64xf32> to vector<8xf32>
    %68 = vector.shape_cast %67 : vector<8xf32> to vector<8x1xf32>
    %c0_29 = arith.constant 0 : index
    %c6 = arith.constant 6 : index
    %c0_30 = arith.constant 0 : index
    %69 = vector.load %arg1[%c0_29, %c6, %c0_30] : memref<8x8x32xf32, #tpu.memory_space<vmem>>, vector<8x1x32xf32>
    %70 = vector.shape_cast %69 : vector<8x1x32xf32> to vector<8x32xf32>
    %71 = arith.truncf %70 : vector<8x32xf32> to vector<8x32xbf16>
    %cst_31 = arith.constant dense<0.000000e+00> : vector<8x64xf32>
    %72 = tpu.matmul %71, %0, %cst_31 {dimension_numbers = #tpu.dot_dimension_numbers<[1], [0], [0], [1], [0, 0, 1, 1], [], []>} : vector<8x32xbf16>, vector<32x64xbf16>, vector<8x64xf32> -> vector<8x64xf32>
    %73 = vector.broadcast %1 : vector<1x64xf32> to vector<8x64xf32>
    %74 = arith.addf %72, %73 : vector<8x64xf32>
    %75 = math.tanh %74 : vector<8x64xf32>
    %76 = vector.broadcast %2 : vector<1x64xf32> to vector<8x64xf32>
    %77 = arith.mulf %75, %76 : vector<8x64xf32>
    %cst_32 = arith.constant dense<0.000000e+00> : vector<8xf32>
    %78 = vector.multi_reduction <add>, %77, %cst_32 [1] : vector<8x64xf32> to vector<8xf32>
    %79 = vector.shape_cast %78 : vector<8xf32> to vector<8x1xf32>
    %c0_33 = arith.constant 0 : index
    %c7 = arith.constant 7 : index
    %c0_34 = arith.constant 0 : index
    %80 = vector.load %arg1[%c0_33, %c7, %c0_34] : memref<8x8x32xf32, #tpu.memory_space<vmem>>, vector<8x1x32xf32>
    %81 = vector.shape_cast %80 : vector<8x1x32xf32> to vector<8x32xf32>
    %82 = arith.truncf %81 : vector<8x32xf32> to vector<8x32xbf16>
    %cst_35 = arith.constant dense<0.000000e+00> : vector<8x64xf32>
    %83 = tpu.matmul %82, %0, %cst_35 {dimension_numbers = #tpu.dot_dimension_numbers<[1], [0], [0], [1], [0, 0, 1, 1], [], []>} : vector<8x32xbf16>, vector<32x64xbf16>, vector<8x64xf32> -> vector<8x64xf32>
    %84 = vector.broadcast %1 : vector<1x64xf32> to vector<8x64xf32>
    %85 = arith.addf %83, %84 : vector<8x64xf32>
    %86 = math.tanh %85 : vector<8x64xf32>
    %87 = vector.broadcast %2 : vector<1x64xf32> to vector<8x64xf32>
    %88 = arith.mulf %86, %87 : vector<8x64xf32>
    %cst_36 = arith.constant dense<0.000000e+00> : vector<8xf32>
    %89 = vector.multi_reduction <add>, %88, %cst_36 [1] : vector<8x64xf32> to vector<8xf32>
    %90 = vector.shape_cast %89 : vector<8xf32> to vector<8x1xf32>
    %91 = arith.maximumf %13, %24 : vector<8x1xf32>
    %92 = arith.maximumf %91, %35 : vector<8x1xf32>
    %93 = arith.maximumf %92, %46 : vector<8x1xf32>
    %94 = arith.maximumf %93, %57 : vector<8x1xf32>
    %95 = arith.maximumf %94, %68 : vector<8x1xf32>
    %96 = arith.maximumf %95, %79 : vector<8x1xf32>
    %97 = arith.maximumf %96, %90 : vector<8x1xf32>
    %98 = arith.subf %13, %97 : vector<8x1xf32>
    %99 = math.exp %98 : vector<8x1xf32>
    %100 = arith.subf %24, %97 : vector<8x1xf32>
    %101 = math.exp %100 : vector<8x1xf32>
    %102 = arith.subf %35, %97 : vector<8x1xf32>
    %103 = math.exp %102 : vector<8x1xf32>
    %104 = arith.subf %46, %97 : vector<8x1xf32>
    %105 = math.exp %104 : vector<8x1xf32>
    %106 = arith.subf %57, %97 : vector<8x1xf32>
    %107 = math.exp %106 : vector<8x1xf32>
    %108 = arith.subf %68, %97 : vector<8x1xf32>
    %109 = math.exp %108 : vector<8x1xf32>
    %110 = arith.subf %79, %97 : vector<8x1xf32>
    %111 = math.exp %110 : vector<8x1xf32>
    %112 = arith.subf %90, %97 : vector<8x1xf32>
    %113 = math.exp %112 : vector<8x1xf32>
    %114 = arith.addf %99, %101 : vector<8x1xf32>
    %115 = arith.addf %114, %103 : vector<8x1xf32>
    %116 = arith.addf %115, %105 : vector<8x1xf32>
    %117 = arith.addf %116, %107 : vector<8x1xf32>
    %118 = arith.addf %117, %109 : vector<8x1xf32>
    %119 = arith.addf %118, %111 : vector<8x1xf32>
    %120 = arith.addf %119, %113 : vector<8x1xf32>
    %121 = tpu.reciprocal %120 {approx = true} : vector<8x1xf32> -> vector<8x1xf32>
    %122 = arith.mulf %99, %121 : vector<8x1xf32>
    %123 = vector.broadcast %122 : vector<8x1xf32> to vector<8x32xf32>
    %124 = arith.mulf %4, %123 : vector<8x32xf32>
    %125 = arith.mulf %101, %121 : vector<8x1xf32>
    %126 = vector.broadcast %125 : vector<8x1xf32> to vector<8x32xf32>
    %127 = arith.mulf %15, %126 : vector<8x32xf32>
    %128 = arith.addf %124, %127 : vector<8x32xf32>
    %129 = arith.mulf %103, %121 : vector<8x1xf32>
    %130 = vector.broadcast %129 : vector<8x1xf32> to vector<8x32xf32>
    %131 = arith.mulf %26, %130 : vector<8x32xf32>
    %132 = arith.addf %128, %131 : vector<8x32xf32>
    %133 = arith.mulf %105, %121 : vector<8x1xf32>
    %134 = vector.broadcast %133 : vector<8x1xf32> to vector<8x32xf32>
    %135 = arith.mulf %37, %134 : vector<8x32xf32>
    %136 = arith.addf %132, %135 : vector<8x32xf32>
    %137 = arith.mulf %107, %121 : vector<8x1xf32>
    %138 = vector.broadcast %137 : vector<8x1xf32> to vector<8x32xf32>
    %139 = arith.mulf %48, %138 : vector<8x32xf32>
    %140 = arith.addf %136, %139 : vector<8x32xf32>
    %141 = arith.mulf %109, %121 : vector<8x1xf32>
    %142 = vector.broadcast %141 : vector<8x1xf32> to vector<8x32xf32>
    %143 = arith.mulf %59, %142 : vector<8x32xf32>
    %144 = arith.addf %140, %143 : vector<8x32xf32>
    %145 = arith.mulf %111, %121 : vector<8x1xf32>
    %146 = vector.broadcast %145 : vector<8x1xf32> to vector<8x32xf32>
    %147 = arith.mulf %70, %146 : vector<8x32xf32>
    %148 = arith.addf %144, %147 : vector<8x32xf32>
    %149 = arith.mulf %113, %121 : vector<8x1xf32>
    %150 = vector.broadcast %149 : vector<8x1xf32> to vector<8x32xf32>
    %151 = arith.mulf %81, %150 : vector<8x32xf32>
    %152 = arith.addf %148, %151 : vector<8x32xf32>
    %153 = arith.truncf %152 : vector<8x32xf32> to vector<8x32xbf16>
    %c0_37 = arith.constant 0 : index
    %c0_38 = arith.constant 0 : index
    %154 = vector.load %arg5[%c0_37, %c0_38] : memref<32x256xbf16, #tpu.memory_space<vmem>>, vector<32x256xbf16>
    %cst_39 = arith.constant dense<0.000000e+00> : vector<8x256xf32>
    %155 = tpu.matmul %153, %154, %cst_39 {dimension_numbers = #tpu.dot_dimension_numbers<[1], [0], [0], [1], [0, 0, 1, 1], [], []>} : vector<8x32xbf16>, vector<32x256xbf16>, vector<8x256xf32> -> vector<8x256xf32>
    %c0_40 = arith.constant 0 : index
    %c0_41 = arith.constant 0 : index
    %156 = vector.load %arg6[%c0_40, %c0_41] : memref<1x256xf32, #tpu.memory_space<vmem>>, vector<1x256xf32>
    %157 = vector.broadcast %156 : vector<1x256xf32> to vector<8x256xf32>
    %158 = arith.addf %155, %157 : vector<8x256xf32>
    %cst_42 = arith.constant 0.000000e+00 : f32
    %159 = vector.broadcast %cst_42 : f32 to vector<8x256xf32>
    %160 = arith.maximumf %158, %159 : vector<8x256xf32>
    %161 = arith.truncf %160 : vector<8x256xf32> to vector<8x256xbf16>
    %c0_43 = arith.constant 0 : index
    %c0_44 = arith.constant 0 : index
    %162 = vector.load %arg7[%c0_43, %c0_44] : memref<256x128xbf16, #tpu.memory_space<vmem>>, vector<256x128xbf16>
    %cst_45 = arith.constant dense<0.000000e+00> : vector<8x128xf32>
    %163 = tpu.matmul %161, %162, %cst_45 {dimension_numbers = #tpu.dot_dimension_numbers<[1], [0], [0], [1], [0, 0, 1, 1], [], []>} : vector<8x256xbf16>, vector<256x128xbf16>, vector<8x128xf32> -> vector<8x128xf32>
    %c0_46 = arith.constant 0 : index
    %c0_47 = arith.constant 0 : index
    %164 = vector.load %arg8[%c0_46, %c0_47] : memref<1x128xf32, #tpu.memory_space<vmem>>, vector<1x128xf32>
    %165 = vector.broadcast %164 : vector<1x128xf32> to vector<8x128xf32>
    %166 = arith.addf %163, %165 : vector<8x128xf32>
    %cst_48 = arith.constant 0.000000e+00 : f32
    %167 = vector.broadcast %cst_48 : f32 to vector<8x128xf32>
    %168 = arith.maximumf %166, %167 : vector<8x128xf32>
    %169 = arith.truncf %168 : vector<8x128xf32> to vector<8x128xbf16>
    %c0_49 = arith.constant 0 : index
    %c0_50 = arith.constant 0 : index
    %170 = vector.load %arg9[%c0_49, %c0_50] : memref<128x128xbf16, #tpu.memory_space<vmem>>, vector<128x128xbf16>
    %cst_51 = arith.constant dense<0.000000e+00> : vector<8x128xf32>
    %171 = tpu.matmul %169, %170, %cst_51 {dimension_numbers = #tpu.dot_dimension_numbers<[1], [0], [0], [1], [0, 0, 1, 1], [], []>} : vector<8x128xbf16>, vector<128x128xbf16>, vector<8x128xf32> -> vector<8x128xf32>
    %c0_52 = arith.constant 0 : index
    %c0_53 = arith.constant 0 : index
    %172 = vector.load %arg10[%c0_52, %c0_53] : memref<1x128xf32, #tpu.memory_space<vmem>>, vector<1x128xf32>
    %173 = vector.broadcast %172 : vector<1x128xf32> to vector<8x128xf32>
    %174 = arith.addf %171, %173 : vector<8x128xf32>
    %c0_54 = arith.constant 0 : index
    %c0_55 = arith.constant 0 : index
    %175 = vector.load %arg11[%c0_54, %c0_55] : memref<8x128xf32, #tpu.memory_space<vmem>>, vector<8x128xf32>
    tpu.vector_store %arg11[%c0_54, %c0_55], %174 {strides = array<i32>} : memref<8x128xf32, #tpu.memory_space<vmem>>, vector<8x128xf32>,
    return
  }
  func.func @transform_0(%arg0: i32) -> (i32, i32, i32) {
    %c0_i32 = arith.constant 0 : i32
    %c0_i32_0 = arith.constant 0 : i32
    %c0_i32_1 = arith.constant 0 : i32
    return %arg0, %c0_i32, %c0_i32_0 : i32, i32, i32
  }
  func.func @transform_1(%arg0: i32) -> (i32, i32) {
    %c0_i32 = arith.constant 0 : i32
    %c0_i32_0 = arith.constant 0 : i32
    %c0_i32_1 = arith.constant 0 : i32
    return %c0_i32, %c0_i32_0 : i32, i32
  }
  func.func @transform_2(%arg0: i32) -> (i32, i32) {
    %c0_i32 = arith.constant 0 : i32
    %c0_i32_0 = arith.constant 0 : i32
    %c0_i32_1 = arith.constant 0 : i32
    return %c0_i32, %c0_i32_0 : i32, i32
  }
  func.func @transform_3(%arg0: i32) -> (i32, i32) {
    %c0_i32 = arith.constant 0 : i32
    %c0_i32_0 = arith.constant 0 : i32
    %c0_i32_1 = arith.constant 0 : i32
    return %c0_i32, %c0_i32_0 : i32, i32
  }
  func.func @transform_4(%arg0: i32) -> (i32, i32) {
    %c0_i32 = arith.constant 0 : i32
    %c0_i32_0 = arith.constant 0 : i32
    %c0_i32_1 = arith.constant 0 : i32
    return %c0_i32, %c0_i32_0 : i32, i32
  }
  func.func @transform_5(%arg0: i32) -> (i32, i32) {
    %c0_i32 = arith.constant 0 : i32
    %c0_i32_0 = arith.constant 0 : i32
    %c0_i32_1 = arith.constant 0 : i32
    return %c0_i32, %c0_i32_0 : i32, i32
  }
  func.func @transform_6(%arg0: i32) -> (i32, i32) {
    %c0_i32 = arith.constant 0 : i32
    %c0_i32_0 = arith.constant 0 : i32
    %c0_i32_1 = arith.constant 0 : i32
    return %c0_i32, %c0_i32_0 : i32, i32
  }
  func.func @transform_7(%arg0: i32) -> (i32, i32) {
    %c0_i32 = arith.constant 0 : i32
    %c0_i32_0 = arith.constant 0 : i32
    %c0_i32_1 = arith.constant 0 : i32
    return %c0_i32, %c0_i32_0 : i32, i32
  }
  func.func @transform_8(%arg0: i32) -> (i32, i32) {
    %c0_i32 = arith.constant 0 : i32
    %c0_i32_0 = arith.constant 0 : i32
    %c0_i32_1 = arith.constant 0 : i32
    return %c0_i32, %c0_i32_0 : i32, i32
  }
  func.func @transform_9(%arg0: i32) -> (i32, i32) {
    %c0_i32 = arith.constant 0 : i32
    %c0_i32_0 = arith.constant 0 : i32
    %c0_i32_1 = arith.constant 0 : i32
    return %c0_i32, %c0_i32_0 : i32, i32
  }
  func.func @transform_10(%arg0: i32) -> (i32, i32) {
    %c0_i32 = arith.constant 0 : i32
    %c0_i32_0 = arith.constant 0 : i32
    return %arg0, %c0_i32 : i32, i32
  }
}

</mosaic_0001>

<llo_original>
// kernel: crop_classification_head.1
$region0: #{crop_classification_head.1}
  #allocation0 [shape = 'u32[]', space=smem, size = 0x4, offset = 0x4, fixed_abs, tag = 'smem constant byte address 0x4 - core index']
  #allocation1 [shape = 'u32[144,128]{1,0:T(1,128)}', space=vmem, size = 0x12000, scoped, tag = 'internal scratch']
  %s0 = inlined_call_operand.vmem [shape: f32[8,8,32], index: 0, kind: input, shape index: {}]
  %s1 = inlined_call_operand.vmem [shape: bf16[32,64], index: 1, kind: input, shape index: {}]
  %s2 = inlined_call_operand.vmem [shape: f32[1,64], index: 2, kind: input, shape index: {}]
  %s3 = inlined_call_operand.vmem [shape: f32[1,64], index: 3, kind: input, shape index: {}]
  %s4 = inlined_call_operand.vmem [shape: bf16[32,256], index: 4, kind: input, shape index: {}]
  %s5 = inlined_call_operand.vmem [shape: f32[1,256], index: 5, kind: input, shape index: {}]
  %s6 = inlined_call_operand.vmem [shape: bf16[256,128], index: 6, kind: input, shape index: {}]
  %s7 = inlined_call_operand.vmem [shape: f32[1,128], index: 7, kind: input, shape index: {}]
  %s8 = inlined_call_operand.vmem [shape: bf16[128,128], index: 8, kind: input, shape index: {}]
  %s9 = inlined_call_operand.vmem [shape: f32[1,128], index: 9, kind: input, shape index: {}]
  %s10 = inlined_call_operand.vmem [shape: f32[8,128], index: 10, kind: output, shape index: {}]
  %s11 = sld [smem:[#allocation0]]
  $region50: #{crop_classification_head.1} parent=0
    _
  %s13 = ssub.s32 1, %s11
  %s14 = scalar_select 0, %s13, %s11
  // Predicated region
  $region2: #{crop_classification_head.1} parent=0 // pred_check
    _
  $region3: #{crop_classification_head.1} parent=0 // pred_check_branch
    %16 = sbr.rel (0) target = $region5
  $region4: #{crop_classification_head.1} parent=0 // pred_region
    _
  $region5: #{crop_classification_head.1} parent=0 // pred_fallthru
    _
  // Predicated region
  $region6: #{crop_classification_head.1} parent=0 // pred_check
    _
  $region7: #{crop_classification_head.1} parent=0 // pred_check_branch
    %18 = sbr.rel (0) target = $region9
  $region8: #{crop_classification_head.1} parent=0 // pred_region
    _
  $region9: #{crop_classification_head.1} parent=0 // pred_fallthru
    _
  // Predicated region
  $region10: #{crop_classification_head.1} parent=0 // pred_check
    _
  $region11: #{crop_classification_head.1} parent=0 // pred_check_branch
    %20 = sbr.rel (0) target = $region13
  $region12: #{crop_classification_head.1} parent=0 // pred_region
    _
  $region13: #{crop_classification_head.1} parent=0 // pred_fallthru
    _
  // Predicated region
  $region14: #{crop_classification_head.1} parent=0 // pred_check
    _
  $region15: #{crop_classification_head.1} parent=0 // pred_check_branch
    %22 = sbr.rel (0) target = $region17
  $region16: #{crop_classification_head.1} parent=0 // pred_region
    _
  $region17: #{crop_classification_head.1} parent=0 // pred_fallthru
    _
  // Predicated region
  $region18: #{crop_classification_head.1} parent=0 // pred_check
    _
  $region19: #{crop_classification_head.1} parent=0 // pred_check_branch
    %24 = sbr.rel (0) target = $region21
  $region20: #{crop_classification_head.1} parent=0 // pred_region
    _
  $region21: #{crop_classification_head.1} parent=0 // pred_fallthru
    _
  // Predicated region
  $region22: #{crop_classification_head.1} parent=0 // pred_check
    _
  $region23: #{crop_classification_head.1} parent=0 // pred_check_branch
    %26 = sbr.rel (0) target = $region25
  $region24: #{crop_classification_head.1} parent=0 // pred_region
    _
  $region25: #{crop_classification_head.1} parent=0 // pred_fallthru
    _
  // Predicated region
  $region26: #{crop_classification_head.1} parent=0 // pred_check
    _
  $region27: #{crop_classification_head.1} parent=0 // pred_check_branch
    %28 = sbr.rel (0) target = $region29
  $region28: #{crop_classification_head.1} parent=0 // pred_region
    _
  $region29: #{crop_classification_head.1} parent=0 // pred_fallthru
    _
  // Predicated region
  $region30: #{crop_classification_head.1} parent=0 // pred_check
    _
  $region31: #{crop_classification_head.1} parent=0 // pred_check_branch
    %30 = sbr.rel (0) target = $region33
  $region32: #{crop_classification_head.1} parent=0 // pred_region
    _
  $region33: #{crop_classification_head.1} parent=0 // pred_fallthru
    _
  // Predicated region
  $region34: #{crop_classification_head.1} parent=0 // pred_check
    _
  $region35: #{crop_classification_head.1} parent=0 // pred_check_branch
    %32 = sbr.rel (0) target = $region37
  $region36: #{crop_classification_head.1} parent=0 // pred_region
    _
  $region37: #{crop_classification_head.1} parent=0 // pred_fallthru
    _
  // Predicated region
  $region38: #{crop_classification_head.1} parent=0 // pred_check
    _
  $region39: #{crop_classification_head.1} parent=0 // pred_check_branch
    %34 = sbr.rel (0) target = $region41
  $region40: #{crop_classification_head.1} parent=0 // pred_region
    _
  $region41: #{crop_classification_head.1} parent=0 // pred_fallthru
    _
  %v36 = vld [vmem:[%s1] sm:$0xf]
  %v37 = vld [vmem:[%s1 + $0x4] sm:$0xf]
  %v38 = vld [vmem:[%s1 + $0x8] sm:$0xf]
  %v39 = vld [vmem:[%s1 + $0xc] sm:$0xf]
  %v40 = vld [vmem:[%s2] sm:$0x1]
  %v41 = vld [vmem:[%s3] sm:$0x1]
  %v42 = vld [vmem:[%s0] sm:$0x1]
  %v43 = vld [vmem:[%s0 + $0x8] sm:$0x1]
  %v44 = vld [vmem:[%s0 + $0x10] sm:$0x1]
  %v45 = vld [vmem:[%s0 + $0x18] sm:$0x1]
  %v46 = vld [vmem:[%s0 + $0x20] sm:$0x1]
  %v47 = vld [vmem:[%s0 + $0x28] sm:$0x1]
  %v48 = vld [vmem:[%s0 + $0x30] sm:$0x1]
  %v49 = vld [vmem:[%s0 + $0x38] sm:$0x1]
  %v50 = vpack.c.bf16 %v42, %v42
  %v51 = vpack.c.bf16 %v43, %v43
  %v52 = vpack.c.bf16 %v44, %v44
  %v53 = vpack.c.bf16 %v45, %v45
  %v54 = vpack.c.bf16 %v46, %v46
  %v55 = vpack.c.bf16 %v47, %v47
  %v56 = vpack.c.bf16 %v48, %v48
  %v57 = vpack.c.bf16 %v49, %v49
  %v59 = vlaneseq
  %v60 = vshrl.u32 %v59, 7
  %v61 = vsub.s32 0, %v60
  %v62 = vrot.slane %v40, %v61
  %v72 = vunpack.c.l.b16 %v50
  %v73 = vunpack.c.l.b16 %v51
  %v74 = vunpack.c.l.b16 %v52
  %v75 = vunpack.c.l.b16 %v53
  %v76 = vunpack.c.l.b16 %v54
  %v77 = vunpack.c.l.b16 %v55
  %v78 = vunpack.c.l.b16 %v56
  %v79 = vunpack.c.l.b16 %v57
  %v80 = vrot.slane %v73, 7
  %vm81 = vcmask 1041409
  %v82 = vsel %vm81, %v80, %v72
  %v83 = vrot.slane %v74, 6
  %vm84 = vcmask 1042434
  %v85 = vsel %vm84, %v83, %v82
  %v86 = vrot.slane %v75, 5
  %vm87 = vcmask 1043459
  %v88 = vsel %vm87, %v86, %v85
  %v89 = vrot.slane %v76, 4
  %vm90 = vcmask 1044484
  %v91 = vsel %vm90, %v89, %v88
  %v92 = vrot.slane %v77, 3
  %vm93 = vcmask 1045509
  %v94 = vsel %vm93, %v92, %v91
  %v95 = vrot.slane %v78, 2
  %vm96 = vcmask 1046534
  %v97 = vsel %vm96, %v95, %v94
  %v98 = vrot.slane %v79, 1
  %vm99 = vcmask 1047559
  %v100 = vsel %vm99, %v98, %v97
  %v101 = vpack.c.b16 %v100, %v100
  %v106 = vunpack.c.l.b16 %v36
  %v107 = vunpack.c.l.b16 %v37
  %v108 = vunpack.c.l.b16 %v38
  %v109 = vunpack.c.l.b16 %v39
  %v110 = vpack.c.b16 %v107, %v106
  %v111 = vpack.c.b16 %v109, %v108
  %vm114 = vcmask 261120
  %v116 = vsel %vm114, %v101, 0
  %118 = vmatprep.subr.bf16.mxu0 0
  %119 = vmatpush1.bf16.msra.mxu0 0
  %120 = vmatprep.subr.bf16.mxu0 0
  %121 = vmatpush1.bf16.msra.mxu0 0
  %122 = vmatprep.subr.bf16.mxu0 0
  %123 = vmatpush1.bf16.msra.mxu0 0
  %124 = vmatprep.subr.bf16.mxu0 0
  %125 = vmatpush1.bf16.msra.mxu0 0
  %126 = vmatprep.subr.bf16.mxu0 0
  %127 = vmatpush1.bf16.msra.mxu0 0
  %128 = vmatprep.subr.bf16.mxu0 0
  %129 = vmatpush1.bf16.msra.mxu0 0
  %130 = vmatprep.subr.bf16.mxu0 0
  %131 = vmatpush1.bf16.msra.mxu0 %v111
  %132 = vmatprep.subr.bf16.mxu0 0
  %133 = vmatpush1.bf16.msra.mxu0 %v110
  %134 = vmatprep.subr.bf16.mxu0 0
  %135 = vmatpush2.bf16.msra.mxu0 0
  %136 = vmatprep.subr.bf16.mxu0 0
  %137 = vmatpush2.bf16.msra.mxu0 0
  %138 = vmatprep.subr.bf16.mxu0 0
  %139 = vmatpush2.bf16.msra.mxu0 0
  %140 = vmatprep.subr.bf16.mxu0 0
  %141 = vmatpush2.bf16.msra.mxu0 0
  %142 = vmatprep.subr.bf16.mxu0 0
  %143 = vmatpush2.bf16.msra.mxu0 0
  %144 = vmatprep.subr.bf16.mxu0 0
  %145 = vmatpush2.bf16.msra.mxu0 0
  %146 = vmatprep.subr.bf16.mxu0 0
  %147 = vmatpush2.bf16.msra.mxu0 0
  %148 = vmatprep.subr.bf16.mxu0 0
  %149 = vmatpush2.bf16.msra.mxu0 0
  %150 = vmatprep.mubr.bf16.mxu0 0
  %151 = vmatmul.mubr.bf16.gmra.mxu0 %v116
  %v152 = vpop.f32.mrf.mxu0
  %v153 = vadd.f32 %v62, %v152
  %v154 = vpop.f32.mrf.mxu0
  %v155 = vpop.f32.mrf.mxu0
  %v156 = vpop.f32.mrf.mxu0
  %157 = vdwg.mxu0
  %v158 = vtanh.pop %v153
  %v160 = vlaneseq
  %v161 = vshrl.u32 %v160, 7
  %v162 = vsub.s32 0, %v161
  %v163 = vrot.slane %v41, %v162
  %v165 = vmul.f32 %v158, %v163
  %vm166 = vcmask 523264
  %v167 = vsel %vm166, %v165, 0.0
  %168 = vadd.xlane.f32.xlu0 %v167
  %v169 = vpop.xlane.xlu0 %168
  %v170 = vld [vmem:[%s0 + $0x1] sm:$0x1]
  %v171 = vld [vmem:[%s0 + $0x9] sm:$0x1]
  %v172 = vld [vmem:[%s0 + $0x11] sm:$0x1]
  %v173 = vld [vmem:[%s0 + $0x19] sm:$0x1]
  %v174 = vld [vmem:[%s0 + $0x21] sm:$0x1]
  %v175 = vld [vmem:[%s0 + $0x29] sm:$0x1]
  %v176 = vld [vmem:[%s0 + $0x31] sm:$0x1]
  %v177 = vld [vmem:[%s0 + $0x39] sm:$0x1]
  %v178 = vpack.c.bf16 %v170, %v170
  %v179 = vpack.c.bf16 %v171, %v171
  %v180 = vpack.c.bf16 %v172, %v172
  %v181 = vpack.c.bf16 %v173, %v173
  %v182 = vpack.c.bf16 %v174, %v174
  %v183 = vpack.c.bf16 %v175, %v175
  %v184 = vpack.c.bf16 %v176, %v176
  %v185 = vpack.c.bf16 %v177, %v177
  %v194 = vunpack.c.l.b16 %v178
  %v195 = vunpack.c.l.b16 %v179
  %v196 = vunpack.c.l.b16 %v180
  %v197 = vunpack.c.l.b16 %v181
  %v198 = vunpack.c.l.b16 %v182
  %v199 = vunpack.c.l.b16 %v183
  %v200 = vunpack.c.l.b16 %v184
  %v201 = vunpack.c.l.b16 %v185
  %v202 = vrot.slane %v195, 7
  %v203 = vsel %vm81, %v202, %v194
  %v204 = vrot.slane %v196, 6
  %v205 = vsel %vm84, %v204, %v203
  %v206 = vrot.slane %v197, 5
  %v207 = vsel %vm87, %v206, %v205
  %v208 = vrot.slane %v198, 4
  %v209 = vsel %vm90, %v208, %v207
  %v210 = vrot.slane %v199, 3
  %v211 = vsel %vm93, %v210, %v209
  %v212 = vrot.slane %v200, 2
  %v213 = vsel %vm96, %v212, %v211
  %v214 = vrot.slane %v201, 1
  %v215 = vsel %vm99, %v214, %v213
  %v216 = vpack.c.b16 %v215, %v215
  %v218 = vsel %vm114, %v216, 0
  %220 = vmatprep.subr.bf16.mxu0 0
  %221 = vmatpush1.bf16.msra.mxu0 0
  %222 = vmatprep.subr.bf16.mxu0 0
  %223 = vmatpush1.bf16.msra.mxu0 0
  %224 = vmatprep.subr.bf16.mxu0 0
  %225 = vmatpush1.bf16.msra.mxu0 0
  %226 = vmatprep.subr.bf16.mxu0 0
  %227 = vmatpush1.bf16.msra.mxu0 0
  %228 = vmatprep.subr.bf16.mxu0 0
  %229 = vmatpush1.bf16.msra.mxu0 0
  %230 = vmatprep.subr.bf16.mxu0 0
  %231 = vmatpush1.bf16.msra.mxu0 0
  %232 = vmatprep.subr.bf16.mxu0 0
  %233 = vmatpush1.bf16.msra.mxu0 %v111
  %234 = vmatprep.subr.bf16.mxu0 0
  %235 = vmatpush1.bf16.msra.mxu0 %v110
  %236 = vmatprep.subr.bf16.mxu0 0
  %237 = vmatpush2.bf16.msra.mxu0 0
  %238 = vmatprep.subr.bf16.mxu0 0
  %239 = vmatpush2.bf16.msra.mxu0 0
  %240 = vmatprep.subr.bf16.mxu0 0
  %241 = vmatpush2.bf16.msra.mxu0 0
  %242 = vmatprep.subr.bf16.mxu0 0
  %243 = vmatpush2.bf16.msra.mxu0 0
  %244 = vmatprep.subr.bf16.mxu0 0
  %245 = vmatpush2.bf16.msra.mxu0 0
  %246 = vmatprep.subr.bf16.mxu0 0
  %247 = vmatpush2.bf16.msra.mxu0 0
  %248 = vmatprep.subr.bf16.mxu0 0
  %249 = vmatpush2.bf16.msra.mxu0 0
  %250 = vmatprep.subr.bf16.mxu0 0
  %251 = vmatpush2.bf16.msra.mxu0 0
  %252 = vmatprep.mubr.bf16.mxu0 0
  %253 = vmatmul.mubr.bf16.gmra.mxu0 %v218
  %v254 = vpop.f32.mrf.mxu0
  %v255 = vadd.f32 %v62, %v254
  %v256 = vpop.f32.mrf.mxu0
  %v257 = vpop.f32.mrf.mxu0
  %v258 = vpop.f32.mrf.mxu0
  %259 = vdwg.mxu0
  %v260 = vtanh.pop %v255
  %v261 = vmul.f32 %v260, %v163
  %v262 = vsel %vm166, %v261, 0.0
  %263 = vadd.xlane.f32.xlu0 %v262
  %v264 = vpop.xlane.xlu0 %263
  %v265 = vld [vmem:[%s0 + $0x2] sm:$0x1]
  %v266 = vld [vmem:[%s0 + $0xa] sm:$0x1]
  %v267 = vld [vmem:[%s0 + $0x12] sm:$0x1]
  %v268 = vld [vmem:[%s0 + $0x1a] sm:$0x1]
  %v269 = vld [vmem:[%s0 + $0x22] sm:$0x1]
  %v270 = vld [vmem:[%s0 + $0x2a] sm:$0x1]
  %v271 = vld [vmem:[%s0 + $0x32] sm:$0x1]
  %v272 = vld [vmem:[%s0 + $0x3a] sm:$0x1]
  %v273 = vpack.c.bf16 %v265, %v265
  %v274 = vpack.c.bf16 %v266, %v266
  %v275 = vpack.c.bf16 %v267, %v267
  %v276 = vpack.c.bf16 %v268, %v268
  %v277 = vpack.c.bf16 %v269, %v269
  %v278 = vpack.c.bf16 %v270, %v270
  %v279 = vpack.c.bf16 %v271, %v271
  %v280 = vpack.c.bf16 %v272, %v272
  %v289 = vunpack.c.l.b16 %v273
  %v290 = vunpack.c.l.b16 %v274
  %v291 = vunpack.c.l.b16 %v275
  %v292 = vunpack.c.l.b16 %v276
  %v293 = vunpack.c.l.b16 %v277
  %v294 = vunpack.c.l.b16 %v278
  %v295 = vunpack.c.l.b16 %v279
  %v296 = vunpack.c.l.b16 %v280
  %v297 = vrot.slane %v290, 7
  %v298 = vsel %vm81, %v297, %v289
  %v299 = vrot.slane %v291, 6
  %v300 = vsel %vm84, %v299, %v298
  %v301 = vrot.slane %v292, 5
  %v302 = vsel %vm87, %v301, %v300
  %v303 = vrot.slane %v293, 4
  %v304 = vsel %vm90, %v303, %v302
  %v305 = vrot.slane %v294, 3
  %v306 = vsel %vm93, %v305, %v304
  %v307 = vrot.slane %v295, 2
  %v308 = vsel %vm96, %v307, %v306
  %v309 = vrot.slane %v296, 1
  %v310 = vsel %vm99, %v309, %v308
  %v311 = vpack.c.b16 %v310, %v310
  %v313 = vsel %vm114, %v311, 0
  %315 = vmatprep.subr.bf16.mxu0 0
  %316 = vmatpush1.bf16.msra.mxu0 0
  %317 = vmatprep.subr.bf16.mxu0 0
  %318 = vmatpush1.bf16.msra.mxu0 0
  %319 = vmatprep.subr.bf16.mxu0 0
  %320 = vmatpush1.bf16.msra.mxu0 0
  %321 = vmatprep.subr.bf16.mxu0 0
  %322 = vmatpush1.bf16.msra.mxu0 0
  %323 = vmatprep.subr.bf16.mxu0 0
  %324 = vmatpush1.bf16.msra.mxu0 0
  %325 = vmatprep.subr.bf16.mxu0 0
  %326 = vmatpush1.bf16.msra.mxu0 0
  %327 = vmatprep.subr.bf16.mxu0 0
  %328 = vmatpush1.bf16.msra.mxu0 %v111
  %329 = vmatprep.subr.bf16.mxu0 0
  %330 = vmatpush1.bf16.msra.mxu0 %v110
  %331 = vmatprep.subr.bf16.mxu0 0
  %332 = vmatpush2.bf16.msra.mxu0 0
  %333 = vmatprep.subr.bf16.mxu0 0
  %334 = vmatpush2.bf16.msra.mxu0 0
  %335 = vmatprep.subr.bf16.mxu0 0
  %336 = vmatpush2.bf16.msra.mxu0 0
  %337 = vmatprep.subr.bf16.mxu0 0
  %338 = vmatpush2.bf16.msra.mxu0 0
  %339 = vmatprep.subr.bf16.mxu0 0
  %340 = vmatpush2.bf16.msra.mxu0 0
  %341 = vmatprep.subr.bf16.mxu0 0
  %342 = vmatpush2.bf16.msra.mxu0 0
  %343 = vmatprep.subr.bf16.mxu0 0
  %344 = vmatpush2.bf16.msra.mxu0 0
  %345 = vmatprep.subr.bf16.mxu0 0
  %346 = vmatpush2.bf16.msra.mxu0 0
  %347 = vmatprep.mubr.bf16.mxu0 0
  %348 = vmatmul.mubr.bf16.gmra.mxu0 %v313
  %v349 = vpop.f32.mrf.mxu0
  %v350 = vadd.f32 %v62, %v349
  %v351 = vpop.f32.mrf.mxu0
  %v352 = vpop.f32.mrf.mxu0
  %v353 = vpop.f32.mrf.mxu0
  %354 = vdwg.mxu0
  %v355 = vtanh.pop %v350
  %v356 = vmul.f32 %v355, %v163
  %v357 = vsel %vm166, %v356, 0.0
  %358 = vadd.xlane.f32.xlu0 %v357
  %v359 = vpop.xlane.xlu0 %358
  %v360 = vld [vmem:[%s0 + $0x3] sm:$0x1]
  %v361 = vld [vmem:[%s0 + $0xb] sm:$0x1]
  %v362 = vld [vmem:[%s0 + $0x13] sm:$0x1]
  %v363 = vld [vmem:[%s0 + $0x1b] sm:$0x1]
  %v364 = vld [vmem:[%s0 + $0x23] sm:$0x1]
  %v365 = vld [vmem:[%s0 + $0x2b] sm:$0x1]
  %v366 = vld [vmem:[%s0 + $0x33] sm:$0x1]
  %v367 = vld [vmem:[%s0 + $0x3b] sm:$0x1]
  %v368 = vpack.c.bf16 %v360, %v360
  %v369 = vpack.c.bf16 %v361, %v361
  %v370 = vpack.c.bf16 %v362, %v362
  %v371 = vpack.c.bf16 %v363, %v363
  %v372 = vpack.c.bf16 %v364, %v364
  %v373 = vpack.c.bf16 %v365, %v365
  %v374 = vpack.c.bf16 %v366, %v366
  %v375 = vpack.c.bf16 %v367, %v367
  %v384 = vunpack.c.l.b16 %v368
  %v385 = vunpack.c.l.b16 %v369
  %v386 = vunpack.c.l.b16 %v370
  %v387 = vunpack.c.l.b16 %v371
  %v388 = vunpack.c.l.b16 %v372
  %v389 = vunpack.c.l.b16 %v373
  %v390 = vunpack.c.l.b16 %v374
  %v391 = vunpack.c.l.b16 %v375
  %v392 = vrot.slane %v385, 7
  %v393 = vsel %vm81, %v392, %v384
  %v394 = vrot.slane %v386, 6
  %v395 = vsel %vm84, %v394, %v393
  %v396 = vrot.slane %v387, 5
  %v397 = vsel %vm87, %v396, %v395
  %v398 = vrot.slane %v388, 4
  %v399 = vsel %vm90, %v398, %v397
  %v400 = vrot.slane %v389, 3
  %v401 = vsel %vm93, %v400, %v399
  %v402 = vrot.slane %v390, 2
  %v403 = vsel %vm96, %v402, %v401
  %v404 = vrot.slane %v391, 1
  %v405 = vsel %vm99, %v404, %v403
  %v406 = vpack.c.b16 %v405, %v405
  %v408 = vsel %vm114, %v406, 0
  %410 = vmatprep.subr.bf16.mxu0 0
  %411 = vmatpush1.bf16.msra.mxu0 0
  %412 = vmatprep.subr.bf16.mxu0 0
  %413 = vmatpush1.bf16.msra.mxu0 0
  %414 = vmatprep.subr.bf16.mxu0 0
  %415 = vmatpush1.bf16.msra.mxu0 0
  %416 = vmatprep.subr.bf16.mxu0 0
  %417 = vmatpush1.bf16.msra.mxu0 0
  %418 = vmatprep.subr.bf16.mxu0 0
  %419 = vmatpush1.bf16.msra.mxu0 0
  %420 = vmatprep.subr.bf16.mxu0 0
  %421 = vmatpush1.bf16.msra.mxu0 0
  %422 = vmatprep.subr.bf16.mxu0 0
  %423 = vmatpush1.bf16.msra.mxu0 %v111
  %424 = vmatprep.subr.bf16.mxu0 0
  %425 = vmatpush1.bf16.msra.mxu0 %v110
  %426 = vmatprep.subr.bf16.mxu0 0
  %427 = vmatpush2.bf16.msra.mxu0 0
  %428 = vmatprep.subr.bf16.mxu0 0
  %429 = vmatpush2.bf16.msra.mxu0 0
  %430 = vmatprep.subr.bf16.mxu0 0
  %431 = vmatpush2.bf16.msra.mxu0 0
  %432 = vmatprep.subr.bf16.mxu0 0
  %433 = vmatpush2.bf16.msra.mxu0 0
  %434 = vmatprep.subr.bf16.mxu0 0
  %435 = vmatpush2.bf16.msra.mxu0 0
  %436 = vmatprep.subr.bf16.mxu0 0
  %437 = vmatpush2.bf16.msra.mxu0 0
  %438 = vmatprep.subr.bf16.mxu0 0
  %439 = vmatpush2.bf16.msra.mxu0 0
  %440 = vmatprep.subr.bf16.mxu0 0
  %441 = vmatpush2.bf16.msra.mxu0 0
  %442 = vmatprep.mubr.bf16.mxu0 0
  %443 = vmatmul.mubr.bf16.gmra.mxu0 %v408
  %v444 = vpop.f32.mrf.mxu0
  %v445 = vadd.f32 %v62, %v444
  %v446 = vpop.f32.mrf.mxu0
  %v447 = vpop.f32.mrf.mxu0
  %v448 = vpop.f32.mrf.mxu0
  %449 = vdwg.mxu0
  %v450 = vtanh.pop %v445
  %v451 = vmul.f32 %v450, %v163
  %v452 = vsel %vm166, %v451, 0.0
  %453 = vadd.xlane.f32.xlu0 %v452
  %v454 = vpop.xlane.xlu0 %453
  %v455 = vld [vmem:[%s0 + $0x4] sm:$0x1]
  %v456 = vld [vmem:[%s0 + $0xc] sm:$0x1]
  %v457 = vld [vmem:[%s0 + $0x14] sm:$0x1]
  %v458 = vld [vmem:[%s0 + $0x1c] sm:$0x1]
  %v459 = vld [vmem:[%s0 + $0x24] sm:$0x1]
  %v460 = vld [vmem:[%s0 + $0x2c] sm:$0x1]
  %v461 = vld [vmem:[%s0 + $0x34] sm:$0x1]
  %v462 = vld [vmem:[%s0 + $0x3c] sm:$0x1]
  %v463 = vpack.c.bf16 %v455, %v455
  %v464 = vpack.c.bf16 %v456, %v456
  %v465 = vpack.c.bf16 %v457, %v457
  %v466 = vpack.c.bf16 %v458, %v458
  %v467 = vpack.c.bf16 %v459, %v459
  %v468 = vpack.c.bf16 %v460, %v460
  %v469 = vpack.c.bf16 %v461, %v461
  %v470 = vpack.c.bf16 %v462, %v462
  %v479 = vunpack.c.l.b16 %v463
  %v480 = vunpack.c.l.b16 %v464
  %v481 = vunpack.c.l.b16 %v465
  %v482 = vunpack.c.l.b16 %v466
  %v483 = vunpack.c.l.b16 %v467
  %v484 = vunpack.c.l.b16 %v468
  %v485 = vunpack.c.l.b16 %v469
  %v486 = vunpack.c.l.b16 %v470
  %v487 = vrot.slane %v480, 7
  %v488 = vsel %vm81, %v487, %v479
  %v489 = vrot.slane %v481, 6
  %v490 = vsel %vm84, %v489, %v488
  %v491 = vrot.slane %v482, 5
  %v492 = vsel %vm87, %v491, %v490
  %v493 = vrot.slane %v483, 4
  %v494 = vsel %vm90, %v493, %v492
  %v495 = vrot.slane %v484, 3
  %v496 = vsel %vm93, %v495, %v494
  %v497 = vrot.slane %v485, 2
  %v498 = vsel %vm96, %v497, %v496
  %v499 = vrot.slane %v486, 1
  %v500 = vsel %vm99, %v499, %v498
  %v501 = vpack.c.b16 %v500, %v500
  %v503 = vsel %vm114, %v501, 0
  %505 = vmatprep.subr.bf16.mxu0 0
  %506 = vmatpush1.bf16.msra.mxu0 0
  %507 = vmatprep.subr.bf16.mxu0 0
  %508 = vmatpush1.bf16.msra.mxu0 0
  %509 = vmatprep.subr.bf16.mxu0 0
  %510 = vmatpush1.bf16.msra.mxu0 0
  %511 = vmatprep.subr.bf16.mxu0 0
  %512 = vmatpush1.bf16.msra.mxu0 0
  %513 = vmatprep.subr.bf16.mxu0 0
  %514 = vmatpush1.bf16.msra.mxu0 0
  %515 = vmatprep.subr.bf16.mxu0 0
  %516 = vmatpush1.bf16.msra.mxu0 0
  %517 = vmatprep.subr.bf16.mxu0 0
  %518 = vmatpush1.bf16.msra.mxu0 %v111
  %519 = vmatprep.subr.bf16.mxu0 0
  %520 = vmatpush1.bf16.msra.mxu0 %v110
  %521 = vmatprep.subr.bf16.mxu0 0
  %522 = vmatpush2.bf16.msra.mxu0 0
  %523 = vmatprep.subr.bf16.mxu0 0
  %524 = vmatpush2.bf16.msra.mxu0 0
  %525 = vmatprep.subr.bf16.mxu0 0
  %526 = vmatpush2.bf16.msra.mxu0 0
  %527 = vmatprep.subr.bf16.mxu0 0
  %528 = vmatpush2.bf16.msra.mxu0 0
  %529 = vmatprep.subr.bf16.mxu0 0
  %530 = vmatpush2.bf16.msra.mxu0 0
  %531 = vmatprep.subr.bf16.mxu0 0
  %532 = vmatpush2.bf16.msra.mxu0 0
  %533 = vmatprep.subr.bf16.mxu0 0
  %534 = vmatpush2.bf16.msra.mxu0 0
  %535 = vmatprep.subr.bf16.mxu0 0
  %536 = vmatpush2.bf16.msra.mxu0 0
  %537 = vmatprep.mubr.bf16.mxu0 0
  %538 = vmatmul.mubr.bf16.gmra.mxu0 %v503
  %v539 = vpop.f32.mrf.mxu0
  %v540 = vadd.f32 %v62, %v539
  %v541 = vpop.f32.mrf.mxu0
  %v542 = vpop.f32.mrf.mxu0
  %v543 = vpop.f32.mrf.mxu0
  %544 = vdwg.mxu0
  %v545 = vtanh.pop %v540
  %v546 = vmul.f32 %v545, %v163
  %v547 = vsel %vm166, %v546, 0.0
  %548 = vadd.xlane.f32.xlu0 %v547
  %v549 = vpop.xlane.xlu0 %548
  %v550 = vld [vmem:[%s0 + $0x5] sm:$0x1]
  %v551 = vld [vmem:[%s0 + $0xd] sm:$0x1]
  %v552 = vld [vmem:[%s0 + $0x15] sm:$0x1]
  %v553 = vld [vmem:[%s0 + $0x1d] sm:$0x1]
  %v554 = vld [vmem:[%s0 + $0x25] sm:$0x1]
  %v555 = vld [vmem:[%s0 + $0x2d] sm:$0x1]
  %v556 = vld [vmem:[%s0 + $0x35] sm:$0x1]
  %v557 = vld [vmem:[%s0 + $0x3d] sm:$0x1]
  %v558 = vpack.c.bf16 %v550, %v550
  %v559 = vpack.c.bf16 %v551, %v551
  %v560 = vpack.c.bf16 %v552, %v552
  %v561 = vpack.c.bf16 %v553, %v553
  %v562 = vpack.c.bf16 %v554, %v554
  %v563 = vpack.c.bf16 %v555, %v555
  %v564 = vpack.c.bf16 %v556, %v556
  %v565 = vpack.c.bf16 %v557, %v557
  %v574 = vunpack.c.l.b16 %v558
  %v575 = vunpack.c.l.b16 %v559
  %v576 = vunpack.c.l.b16 %v560
  %v577 = vunpack.c.l.b16 %v561
  %v578 = vunpack.c.l.b16 %v562
  %v579 = vunpack.c.l.b16 %v563
  %v580 = vunpack.c.l.b16 %v564
  %v581 = vunpack.c.l.b16 %v565
  %v582 = vrot.slane %v575, 7
  %v583 = vsel %vm81, %v582, %v574
  %v584 = vrot.slane %v576, 6
  %v585 = vsel %vm84, %v584, %v583
  %v586 = vrot.slane %v577, 5
  %v587 = vsel %vm87, %v586, %v585
  %v588 = vrot.slane %v578, 4
  %v589 = vsel %vm90, %v588, %v587
  %v590 = vrot.slane %v579, 3
  %v591 = vsel %vm93, %v590, %v589
  %v592 = vrot.slane %v580, 2
  %v593 = vsel %vm96, %v592, %v591
  %v594 = vrot.slane %v581, 1
  %v595 = vsel %vm99, %v594, %v593
  %v596 = vpack.c.b16 %v595, %v595
  %v598 = vsel %vm114, %v596, 0
  %600 = vmatprep.subr.bf16.mxu0 0
  %601 = vmatpush1.bf16.msra.mxu0 0
  %602 = vmatprep.subr.bf16.mxu0 0
  %603 = vmatpush1.bf16.msra.mxu0 0
  %604 = vmatprep.subr.bf16.mxu0 0
  %605 = vmatpush1.bf16.msra.mxu0 0
  %606 = vmatprep.subr.bf16.mxu0 0
  %607 = vmatpush1.bf16.msra.mxu0 0
  %608 = vmatprep.subr.bf16.mxu0 0
  %609 = vmatpush1.bf16.msra.mxu0 0
  %610 = vmatprep.subr.bf16.mxu0 0
  %611 = vmatpush1.bf16.msra.mxu0 0
  %612 = vmatprep.subr.bf16.mxu0 0
  %613 = vmatpush1.bf16.msra.mxu0 %v111
  %614 = vmatprep.subr.bf16.mxu0 0
  %615 = vmatpush1.bf16.msra.mxu0 %v110
  %616 = vmatprep.subr.bf16.mxu0 0
  %617 = vmatpush2.bf16.msra.mxu0 0
  %618 = vmatprep.subr.bf16.mxu0 0
  %619 = vmatpush2.bf16.msra.mxu0 0
  %620 = vmatprep.subr.bf16.mxu0 0
  %621 = vmatpush2.bf16.msra.mxu0 0
  %622 = vmatprep.subr.bf16.mxu0 0
  %623 = vmatpush2.bf16.msra.mxu0 0
  %624 = vmatprep.subr.bf16.mxu0 0
  %625 = vmatpush2.bf16.msra.mxu0 0
  %626 = vmatprep.subr.bf16.mxu0 0
  %627 = vmatpush2.bf16.msra.mxu0 0
  %628 = vmatprep.subr.bf16.mxu0 0
  %629 = vmatpush2.bf16.msra.mxu0 0
  %630 = vmatprep.subr.bf16.mxu0 0
  %631 = vmatpush2.bf16.msra.mxu0 0
  %632 = vmatprep.mubr.bf16.mxu0 0
  %633 = vmatmul.mubr.bf16.gmra.mxu0 %v598
  %v634 = vpop.f32.mrf.mxu0
  %v635 = vadd.f32 %v62, %v634
  %v636 = vpop.f32.mrf.mxu0
  %v637 = vpop.f32.mrf.mxu0
  %v638 = vpop.f32.mrf.mxu0
  %639 = vdwg.mxu0
  %v640 = vtanh.pop %v635
  %v641 = vmul.f32 %v640, %v163
  %v642 = vsel %vm166, %v641, 0.0
  %643 = vadd.xlane.f32.xlu0 %v642
  %v644 = vpop.xlane.xlu0 %643
  %v645 = vld [vmem:[%s0 + $0x6] sm:$0x1]
  %v646 = vld [vmem:[%s0 + $0xe] sm:$0x1]
  %v647 = vld [vmem:[%s0 + $0x16] sm:$0x1]
  %v648 = vld [vmem:[%s0 + $0x1e] sm:$0x1]
  %v649 = vld [vmem:[%s0 + $0x26] sm:$0x1]
  %v650 = vld [vmem:[%s0 + $0x2e] sm:$0x1]
  %v651 = vld [vmem:[%s0 + $0x36] sm:$0x1]
  %v652 = vld [vmem:[%s0 + $0x3e] sm:$0x1]
  %v653 = vpack.c.bf16 %v645, %v645
  %v654 = vpack.c.bf16 %v646, %v646
  %v655 = vpack.c.bf16 %v647, %v647
  %v656 = vpack.c.bf16 %v648, %v648
  %v657 = vpack.c.bf16 %v649, %v649
  %v658 = vpack.c.bf16 %v650, %v650
  %v659 = vpack.c.bf16 %v651, %v651
  %v660 = vpack.c.bf16 %v652, %v652
  %v669 = vunpack.c.l.b16 %v653
  %v670 = vunpack.c.l.b16 %v654
  %v671 = vunpack.c.l.b16 %v655
  %v672 = vunpack.c.l.b16 %v656
  %v673 = vunpack.c.l.b16 %v657
  %v674 = vunpack.c.l.b16 %v658
  %v675 = vunpack.c.l.b16 %v659
  %v676 = vunpack.c.l.b16 %v660
  %v677 = vrot.slane %v670, 7
  %v678 = vsel %vm81, %v677, %v669
  %v679 = vrot.slane %v671, 6
  %v680 = vsel %vm84, %v679, %v678
  %v681 = vrot.slane %v672, 5
  %v682 = vsel %vm87, %v681, %v680
  %v683 = vrot.slane %v673, 4
  %v684 = vsel %vm90, %v683, %v682
  %v685 = vrot.slane %v674, 3
  %v686 = vsel %vm93, %v685, %v684
  %v687 = vrot.slane %v675, 2
  %v688 = vsel %vm96, %v687, %v686
  %v689 = vrot.slane %v676, 1
  %v690 = vsel %vm99, %v689, %v688
  %v691 = vpack.c.b16 %v690, %v690
  %v693 = vsel %vm114, %v691, 0
  %695 = vmatprep.subr.bf16.mxu0 0
  %696 = vmatpush1.bf16.msra.mxu0 0
  %697 = vmatprep.subr.bf16.mxu0 0
  %698 = vmatpush1.bf16.msra.mxu0 0
  %699 = vmatprep.subr.bf16.mxu0 0
  %700 = vmatpush1.bf16.msra.mxu0 0
  %701 = vmatprep.subr.bf16.mxu0 0
  %702 = vmatpush1.bf16.msra.mxu0 0
  %703 = vmatprep.subr.bf16.mxu0 0
  %704 = vmatpush1.bf16.msra.mxu0 0
  %705 = vmatprep.subr.bf16.mxu0 0
  %706 = vmatpush1.bf16.msra.mxu0 0
  %707 = vmatprep.subr.bf16.mxu0 0
  %708 = vmatpush1.bf16.msra.mxu0 %v111
  %709 = vmatprep.subr.bf16.mxu0 0
  %710 = vmatpush1.bf16.msra.mxu0 %v110
  %711 = vmatprep.subr.bf16.mxu0 0
  %712 = vmatpush2.bf16.msra.mxu0 0
  %713 = vmatprep.subr.bf16.mxu0 0
  %714 = vmatpush2.bf16.msra.mxu0 0
  %715 = vmatprep.subr.bf16.mxu0 0
  %716 = vmatpush2.bf16.msra.mxu0 0
  %717 = vmatprep.subr.bf16.mxu0 0
  %718 = vmatpush2.bf16.msra.mxu0 0
  %719 = vmatprep.subr.bf16.mxu0 0
  %720 = vmatpush2.bf16.msra.mxu0 0
  %721 = vmatprep.subr.bf16.mxu0 0
  %722 = vmatpush2.bf16.msra.mxu0 0
  %723 = vmatprep.subr.bf16.mxu0 0
  %724 = vmatpush2.bf16.msra.mxu0 0
  %725 = vmatprep.subr.bf16.mxu0 0
  %726 = vmatpush2.bf16.msra.mxu0 0
  %727 = vmatprep.mubr.bf16.mxu0 0
  %728 = vmatmul.mubr.bf16.gmra.mxu0 %v693
  %v729 = vpop.f32.mrf.mxu0
  %v730 = vadd.f32 %v62, %v729
  %v731 = vpop.f32.mrf.mxu0
  %v732 = vpop.f32.mrf.mxu0
  %v733 = vpop.f32.mrf.mxu0
  %734 = vdwg.mxu0
  %v735 = vtanh.pop %v730
  %v736 = vmul.f32 %v735, %v163
  %v737 = vsel %vm166, %v736, 0.0
  %738 = vadd.xlane.f32.xlu0 %v737
  %v739 = vpop.xlane.xlu0 %738
  %v740 = vld [vmem:[%s0 + $0x7] sm:$0x1]
  %v741 = vld [vmem:[%s0 + $0xf] sm:$0x1]
  %v742 = vld [vmem:[%s0 + $0x17] sm:$0x1]
  %v743 = vld [vmem:[%s0 + $0x1f] sm:$0x1]
  %v744 = vld [vmem:[%s0 + $0x27] sm:$0x1]
  %v745 = vld [vmem:[%s0 + $0x2f] sm:$0x1]
  %v746 = vld [vmem:[%s0 + $0x37] sm:$0x1]
  %v747 = vld [vmem:[%s0 + $0x3f] sm:$0x1]
  %v748 = vpack.c.bf16 %v740, %v740
  %v749 = vpack.c.bf16 %v741, %v741
  %v750 = vpack.c.bf16 %v742, %v742
  %v751 = vpack.c.bf16 %v743, %v743
  %v752 = vpack.c.bf16 %v744, %v744
  %v753 = vpack.c.bf16 %v745, %v745
  %v754 = vpack.c.bf16 %v746, %v746
  %v755 = vpack.c.bf16 %v747, %v747
  %v764 = vunpack.c.l.b16 %v748
  %v765 = vunpack.c.l.b16 %v749
  %v766 = vunpack.c.l.b16 %v750
  %v767 = vunpack.c.l.b16 %v751
  %v768 = vunpack.c.l.b16 %v752
  %v769 = vunpack.c.l.b16 %v753
  %v770 = vunpack.c.l.b16 %v754
  %v771 = vunpack.c.l.b16 %v755
  %v772 = vrot.slane %v765, 7
  %v773 = vsel %vm81, %v772, %v764
  %v774 = vrot.slane %v766, 6
  %v775 = vsel %vm84, %v774, %v773
  %v776 = vrot.slane %v767, 5
  %v777 = vsel %vm87, %v776, %v775
  %v778 = vrot.slane %v768, 4
  %v779 = vsel %vm90, %v778, %v777
  %v780 = vrot.slane %v769, 3
  %v781 = vsel %vm93, %v780, %v779
  %v782 = vrot.slane %v770, 2
  %v783 = vsel %vm96, %v782, %v781
  %v784 = vrot.slane %v771, 1
  %v785 = vsel %vm99, %v784, %v783
  %v786 = vpack.c.b16 %v785, %v785
  %v788 = vsel %vm114, %v786, 0
  %790 = vmatprep.subr.bf16.mxu0 0
  %791 = vmatpush1.bf16.msra.mxu0 0
  %792 = vmatprep.subr.bf16.mxu0 0
  %793 = vmatpush1.bf16.msra.mxu0 0
  %794 = vmatprep.subr.bf16.mxu0 0
  %795 = vmatpush1.bf16.msra.mxu0 0
  %796 = vmatprep.subr.bf16.mxu0 0
  %797 = vmatpush1.bf16.msra.mxu0 0
  %798 = vmatprep.subr.bf16.mxu0 0
  %799 = vmatpush1.bf16.msra.mxu0 0
  %800 = vmatprep.subr.bf16.mxu0 0
  %801 = vmatpush1.bf16.msra.mxu0 0
  %802 = vmatprep.subr.bf16.mxu0 0
  %803 = vmatpush1.bf16.msra.mxu0 %v111
  %804 = vmatprep.subr.bf16.mxu0 0
  %805 = vmatpush1.bf16.msra.mxu0 %v110
  %806 = vmatprep.subr.bf16.mxu0 0
  %807 = vmatpush2.bf16.msra.mxu0 0
  %808 = vmatprep.subr.bf16.mxu0 0
  %809 = vmatpush2.bf16.msra.mxu0 0
  %810 = vmatprep.subr.bf16.mxu0 0
  %811 = vmatpush2.bf16.msra.mxu0 0
  %812 = vmatprep.subr.bf16.mxu0 0
  %813 = vmatpush2.bf16.msra.mxu0 0
  %814 = vmatprep.subr.bf16.mxu0 0
  %815 = vmatpush2.bf16.msra.mxu0 0
  %816 = vmatprep.subr.bf16.mxu0 0
  %817 = vmatpush2.bf16.msra.mxu0 0
  %818 = vmatprep.subr.bf16.mxu0 0
  %819 = vmatpush2.bf16.msra.mxu0 0
  %820 = vmatprep.subr.bf16.mxu0 0
  %821 = vmatpush2.bf16.msra.mxu0 0
  %822 = vmatprep.mubr.bf16.mxu0 0
  %823 = vmatmul.mubr.bf16.gmra.mxu0 %v788
  %v824 = vpop.f32.mrf.mxu0
  %v825 = vadd.f32 %v62, %v824
  %v826 = vpop.f32.mrf.mxu0
  %v827 = vpop.f32.mrf.mxu0
  %v828 = vpop.f32.mrf.mxu0
  %829 = vdwg.mxu0
  %v830 = vtanh.pop %v825
  %v831 = vmul.f32 %v830, %v163
  %v832 = vsel %vm166, %v831, 0.0
  %833 = vadd.xlane.f32.xlu0 %v832
  %v834 = vpop.xlane.xlu0 %833
  %v835 = vmax.f32 %v169, %v264
  %v836 = vmax.f32 %v835, %v359
  %v837 = vmax.f32 %v836, %v454
  %v838 = vmax.f32 %v837, %v549
  %v839 = vmax.f32 %v838, %v644
  %v840 = vmax.f32 %v839, %v739
  %v841 = vmax.f32 %v840, %v834
  %v842 = vsub.f32 %v169, %v841
  %v843 = vmul.f32 %v842, 1.442695
  %v844 = vpow.pop %v843
  %v845 = vsub.f32 %v264, %v841
  %v846 = vmul.f32 %v845, 1.442695
  %v847 = vpow.pop %v846
  %v848 = vsub.f32 %v359, %v841
  %v849 = vmul.f32 %v848, 1.442695
  %v850 = vpow.pop %v849
  %v851 = vsub.f32 %v454, %v841
  %v852 = vmul.f32 %v851, 1.442695
  %v853 = vpow.pop %v852
  %v854 = vsub.f32 %v549, %v841
  %v855 = vmul.f32 %v854, 1.442695
  %v856 = vpow.pop %v855
  %v857 = vsub.f32 %v644, %v841
  %v858 = vmul.f32 %v857, 1.442695
  %v859 = vpow.pop %v858
  %v860 = vsub.f32 %v739, %v841
  %v861 = vmul.f32 %v860, 1.442695
  %v862 = vpow.pop %v861
  %v863 = vsub.f32 %v834, %v841
  %v864 = vmul.f32 %v863, 1.442695
  %v865 = vpow.pop %v864
  %v866 = vadd.f32 %v844, %v847
  %v867 = vadd.f32 %v866, %v850
  %v868 = vadd.f32 %v867, %v853
  %v869 = vadd.f32 %v868, %v856
  %v870 = vadd.f32 %v869, %v859
  %v871 = vadd.f32 %v870, %v862
  %v872 = vadd.f32 %v871, %v865
  %v873 = vrcp.pop %v872
  %v874 = vmul.f32 %v844, %v873
  %v876 = vrot.slane %v874, 1
  %v877 = vrot.slane %v874, 2
  %v878 = vrot.slane %v874, 3
  %v879 = vrot.slane %v874, 4
  %v880 = vrot.slane %v874, 5
  %v881 = vrot.slane %v874, 6
  %v882 = vrot.slane %v874, 7
  %v891 = vmul.f32 %v42, %v874
  %v892 = vmul.f32 %v43, %v876
  %v893 = vmul.f32 %v44, %v877
  %v894 = vmul.f32 %v45, %v878
  %v895 = vmul.f32 %v46, %v879
  %v896 = vmul.f32 %v47, %v880
  %v897 = vmul.f32 %v48, %v881
  %v898 = vmul.f32 %v49, %v882
  %v899 = vmul.f32 %v847, %v873
  %v901 = vrot.slane %v899, 1
  %v902 = vrot.slane %v899, 2
  %v903 = vrot.slane %v899, 3
  %v904 = vrot.slane %v899, 4
  %v905 = vrot.slane %v899, 5
  %v906 = vrot.slane %v899, 6
  %v907 = vrot.slane %v899, 7
  %v916 = vmul.f32 %v170, %v899
  %v917 = vmul.f32 %v171, %v901
  %v918 = vmul.f32 %v172, %v902
  %v919 = vmul.f32 %v173, %v903
  %v920 = vmul.f32 %v174, %v904
  %v921 = vmul.f32 %v175, %v905
  %v922 = vmul.f32 %v176, %v906
  %v923 = vmul.f32 %v177, %v907
  %v924 = vadd.f32 %v891, %v916
  %v925 = vadd.f32 %v892, %v917
  %v926 = vadd.f32 %v893, %v918
  %v927 = vadd.f32 %v894, %v919
  %v928 = vadd.f32 %v895, %v920
  %v929 = vadd.f32 %v896, %v921
  %v930 = vadd.f32 %v897, %v922
  %v931 = vadd.f32 %v898, %v923
  %v932 = vmul.f32 %v850, %v873
  %v934 = vrot.slane %v932, 1
  %v935 = vrot.slane %v932, 2
  %v936 = vrot.slane %v932, 3
  %v937 = vrot.slane %v932, 4
  %v938 = vrot.slane %v932, 5
  %v939 = vrot.slane %v932, 6
  %v940 = vrot.slane %v932, 7
  %v949 = vmul.f32 %v265, %v932
  %v950 = vmul.f32 %v266, %v934
  %v951 = vmul.f32 %v267, %v935
  %v952 = vmul.f32 %v268, %v936
  %v953 = vmul.f32 %v269, %v937
  %v954 = vmul.f32 %v270, %v938
  %v955 = vmul.f32 %v271, %v939
  %v956 = vmul.f32 %v272, %v940
  %v957 = vadd.f32 %v924, %v949
  %v958 = vadd.f32 %v925, %v950
  %v959 = vadd.f32 %v926, %v951
  %v960 = vadd.f32 %v927, %v952
  %v961 = vadd.f32 %v928, %v953
  %v962 = vadd.f32 %v929, %v954
  %v963 = vadd.f32 %v930, %v955
  %v964 = vadd.f32 %v931, %v956
  %v965 = vmul.f32 %v853, %v873
  %v967 = vrot.slane %v965, 1
  %v968 = vrot.slane %v965, 2
  %v969 = vrot.slane %v965, 3
  %v970 = vrot.slane %v965, 4
  %v971 = vrot.slane %v965, 5
  %v972 = vrot.slane %v965, 6
  %v973 = vrot.slane %v965, 7
  %v982 = vmul.f32 %v360, %v965
  %v983 = vmul.f32 %v361, %v967
  %v984 = vmul.f32 %v362, %v968
  %v985 = vmul.f32 %v363, %v969
  %v986 = vmul.f32 %v364, %v970
  %v987 = vmul.f32 %v365, %v971
  %v988 = vmul.f32 %v366, %v972
  %v989 = vmul.f32 %v367, %v973
  %v990 = vadd.f32 %v957, %v982
  %v991 = vadd.f32 %v958, %v983
  %v992 = vadd.f32 %v959, %v984
  %v993 = vadd.f32 %v960, %v985
  %v994 = vadd.f32 %v961, %v986
  %v995 = vadd.f32 %v962, %v987
  %v996 = vadd.f32 %v963, %v988
  %v997 = vadd.f32 %v964, %v989
  %v998 = vmul.f32 %v856, %v873
  %v1000 = vrot.slane %v998, 1
  %v1001 = vrot.slane %v998, 2
  %v1002 = vrot.slane %v998, 3
  %v1003 = vrot.slane %v998, 4
  %v1004 = vrot.slane %v998, 5
  %v1005 = vrot.slane %v998, 6
  %v1006 = vrot.slane %v998, 7
  %v1015 = vmul.f32 %v455, %v998
  %v1016 = vmul.f32 %v456, %v1000
  %v1017 = vmul.f32 %v457, %v1001
  %v1018 = vmul.f32 %v458, %v1002
  %v1019 = vmul.f32 %v459, %v1003
  %v1020 = vmul.f32 %v460, %v1004
  %v1021 = vmul.f32 %v461, %v1005
  %v1022 = vmul.f32 %v462, %v1006
  %v1023 = vadd.f32 %v990, %v1015
  %v1024 = vadd.f32 %v991, %v1016
  %v1025 = vadd.f32 %v992, %v1017
  %v1026 = vadd.f32 %v993, %v1018
  %v1027 = vadd.f32 %v994, %v1019
  %v1028 = vadd.f32 %v995, %v1020
  %v1029 = vadd.f32 %v996, %v1021
  %v1030 = vadd.f32 %v997, %v1022
  %v1031 = vmul.f32 %v859, %v873
  %v1033 = vrot.slane %v1031, 1
  %v1034 = vrot.slane %v1031, 2
  %v1035 = vrot.slane %v1031, 3
  %v1036 = vrot.slane %v1031, 4
  %v1037 = vrot.slane %v1031, 5
  %v1038 = vrot.slane %v1031, 6
  %v1039 = vrot.slane %v1031, 7
  %v1048 = vmul.f32 %v550, %v1031
  %v1049 = vmul.f32 %v551, %v1033
  %v1050 = vmul.f32 %v552, %v1034
  %v1051 = vmul.f32 %v553, %v1035
  %v1052 = vmul.f32 %v554, %v1036
  %v1053 = vmul.f32 %v555, %v1037
  %v1054 = vmul.f32 %v556, %v1038
  %v1055 = vmul.f32 %v557, %v1039
  %v1056 = vadd.f32 %v1023, %v1048
  %v1057 = vadd.f32 %v1024, %v1049
  %v1058 = vadd.f32 %v1025, %v1050
  %v1059 = vadd.f32 %v1026, %v1051
  %v1060 = vadd.f32 %v1027, %v1052
  %v1061 = vadd.f32 %v1028, %v1053
  %v1062 = vadd.f32 %v1029, %v1054
  %v1063 = vadd.f32 %v1030, %v1055
  %v1064 = vmul.f32 %v862, %v873
  %v1066 = vrot.slane %v1064, 1
  %v1067 = vrot.slane %v1064, 2
  %v1068 = vrot.slane %v1064, 3
  %v1069 = vrot.slane %v1064, 4
  %v1070 = vrot.slane %v1064, 5
  %v1071 = vrot.slane %v1064, 6
  %v1072 = vrot.slane %v1064, 7
  %v1081 = vmul.f32 %v645, %v1064
  %v1082 = vmul.f32 %v646, %v1066
  %v1083 = vmul.f32 %v647, %v1067
  %v1084 = vmul.f32 %v648, %v1068
  %v1085 = vmul.f32 %v649, %v1069
  %v1086 = vmul.f32 %v650, %v1070
  %v1087 = vmul.f32 %v651, %v1071
  %v1088 = vmul.f32 %v652, %v1072
  %v1089 = vadd.f32 %v1056, %v1081
  %v1090 = vadd.f32 %v1057, %v1082
  %v1091 = vadd.f32 %v1058, %v1083
  %v1092 = vadd.f32 %v1059, %v1084
  %v1093 = vadd.f32 %v1060, %v1085
  %v1094 = vadd.f32 %v1061, %v1086
  %v1095 = vadd.f32 %v1062, %v1087
  %v1096 = vadd.f32 %v1063, %v1088
  %v1097 = vmul.f32 %v865, %v873
  %v1099 = vrot.slane %v1097, 1
  %v1100 = vrot.slane %v1097, 2
  %v1101 = vrot.slane %v1097, 3
  %v1102 = vrot.slane %v1097, 4
  %v1103 = vrot.slane %v1097, 5
  %v1104 = vrot.slane %v1097, 6
  %v1105 = vrot.slane %v1097, 7
  %v1114 = vmul.f32 %v740, %v1097
  %v1115 = vmul.f32 %v741, %v1099
  %v1116 = vmul.f32 %v742, %v1100
  %v1117 = vmul.f32 %v743, %v1101
  %v1118 = vmul.f32 %v744, %v1102
  %v1119 = vmul.f32 %v745, %v1103
  %v1120 = vmul.f32 %v746, %v1104
  %v1121 = vmul.f32 %v747, %v1105
  %v1122 = vadd.f32 %v1089, %v1114
  %v1123 = vadd.f32 %v1090, %v1115
  %v1124 = vadd.f32 %v1091, %v1116
  %v1125 = vadd.f32 %v1092, %v1117
  %v1126 = vadd.f32 %v1093, %v1118
  %v1127 = vadd.f32 %v1094, %v1119
  %v1128 = vadd.f32 %v1095, %v1120
  %v1129 = vadd.f32 %v1096, %v1121
  %v1130 = vpack.c.bf16 %v1122, %v1122
  %v1131 = vpack.c.bf16 %v1123, %v1123
  %v1132 = vpack.c.bf16 %v1124, %v1124
  %v1133 = vpack.c.bf16 %v1125, %v1125
  %v1134 = vpack.c.bf16 %v1126, %v1126
  %v1135 = vpack.c.bf16 %v1127, %v1127
  %v1136 = vpack.c.bf16 %v1128, %v1128
  %v1137 = vpack.c.bf16 %v1129, %v1129
  %v1138 = vld [vmem:[%s4] sm:$0xff]
  %v1139 = vld [vmem:[%s4 + $0x8] sm:$0xff]
  %v1140 = vld [vmem:[%s4 + $0x10] sm:$0xff]
  %v1141 = vld [vmem:[%s4 + $0x18] sm:$0xff]
  %v1142 = vld [vmem:[%s5] sm:$0x3]
  %v1144 = vlaneseq
  %v1145 = vshrl.u32 %v1144, 7
  %v1146 = vsub.s32 0, %v1145
  %v1147 = vrot.slane %v1142, %v1146
  %v1148 = vlaneseq
  %v1149 = vshrl.u32 %v1148, 7
  %v1150 = vsub.s32 1, %v1149
  %v1151 = vrot.slane %v1142, %v1150
  %v1162 = vunpack.c.l.b16 %v1130
  %v1163 = vunpack.c.l.b16 %v1131
  %v1164 = vunpack.c.l.b16 %v1132
  %v1165 = vunpack.c.l.b16 %v1133
  %v1166 = vunpack.c.l.b16 %v1134
  %v1167 = vunpack.c.l.b16 %v1135
  %v1168 = vunpack.c.l.b16 %v1136
  %v1169 = vunpack.c.l.b16 %v1137
  %v1170 = vrot.slane %v1163, 7
  %v1171 = vsel %vm81, %v1170, %v1162
  %v1172 = vrot.slane %v1164, 6
  %v1173 = vsel %vm84, %v1172, %v1171
  %v1174 = vrot.slane %v1165, 5
  %v1175 = vsel %vm87, %v1174, %v1173
  %v1176 = vrot.slane %v1166, 4
  %v1177 = vsel %vm90, %v1176, %v1175
  %v1178 = vrot.slane %v1167, 3
  %v1179 = vsel %vm93, %v1178, %v1177
  %v1180 = vrot.slane %v1168, 2
  %v1181 = vsel %vm96, %v1180, %v1179
  %v1182 = vrot.slane %v1169, 1
  %v1183 = vsel %vm99, %v1182, %v1181
  %v1184 = vpack.c.b16 %v1183, %v1183
  %v1189 = vunpack.c.l.b16 %v1138
  %v1190 = vunpack.c.h.b16 %v1138
  %v1191 = vunpack.c.l.b16 %v1139
  %v1192 = vunpack.c.h.b16 %v1139
  %v1193 = vunpack.c.l.b16 %v1140
  %v1194 = vunpack.c.h.b16 %v1140
  %v1195 = vunpack.c.l.b16 %v1141
  %v1196 = vunpack.c.h.b16 %v1141
  %v1197 = vpack.c.b16 %v1191, %v1189
  %v1198 = vpack.c.b16 %v1192, %v1190
  %v1199 = vpack.c.b16 %v1195, %v1193
  %v1200 = vpack.c.b16 %v1196, %v1194
  %v1206 = vsel %vm114, %v1184, 0
  %1208 = vmatprep.subr.bf16.mxu0 0
  %1209 = vmatpush1.bf16.msra.mxu0 0
  %1210 = vmatprep.subr.bf16.mxu0 0
  %1211 = vmatpush1.bf16.msra.mxu0 0
  %1212 = vmatprep.subr.bf16.mxu0 0
  %1213 = vmatpush1.bf16.msra.mxu0 0
  %1214 = vmatprep.subr.bf16.mxu0 0
  %1215 = vmatpush1.bf16.msra.mxu0 0
  %1216 = vmatprep.subr.bf16.mxu0 0
  %1217 = vmatpush1.bf16.msra.mxu0 0
  %1218 = vmatprep.subr.bf16.mxu0 0
  %1219 = vmatpush1.bf16.msra.mxu0 0
  %1220 = vmatprep.subr.bf16.mxu0 %v1200
  %1221 = vmatpush1.bf16.msra.mxu0 %v1199
  %1222 = vmatprep.subr.bf16.mxu0 %v1198
  %1223 = vmatpush1.bf16.msra.mxu0 %v1197
  %1224 = vmatprep.subr.bf16.mxu0 0
  %1225 = vmatpush2.bf16.msra.mxu0 0
  %1226 = vmatprep.subr.bf16.mxu0 0
  %1227 = vmatpush2.bf16.msra.mxu0 0
  %1228 = vmatprep.subr.bf16.mxu0 0
  %1229 = vmatpush2.bf16.msra.mxu0 0
  %1230 = vmatprep.subr.bf16.mxu0 0
  %1231 = vmatpush2.bf16.msra.mxu0 0
  %1232 = vmatprep.subr.bf16.mxu0 0
  %1233 = vmatpush2.bf16.msra.mxu0 0
  %1234 = vmatprep.subr.bf16.mxu0 0
  %1235 = vmatpush2.bf16.msra.mxu0 0
  %1236 = vmatprep.subr.bf16.mxu0 0
  %1237 = vmatpush2.bf16.msra.mxu0 0
  %1238 = vmatprep.subr.bf16.mxu0 0
  %1239 = vmatpush2.bf16.msra.mxu0 0
  %1240 = vmatprep.mubr.bf16.mxu0 0
  %1241 = vmatmul.mubr.bf16.gmra.mxu0 %v1206
  %v1242 = vpop.f32.mrf.mxu0
  %v1243 = vadd.f32 %v1147, %v1242
  %v1244 = vpop.f32.mrf.mxu0
  %v1245 = vadd.f32 %v1151, %v1244
  %v1246 = vpop.f32.mrf.mxu0
  %v1247 = vpop.f32.mrf.mxu0
  %1248 = vdwg.mxu0
  %v1249 = vmax.f32 %v1243, 0.0
  %v1250 = vmax.f32 %v1245, 0.0
  %v1251 = vpack.c.bf16 %v1249, %v1249
  %v1252 = vpack.c.bf16 %v1250, %v1250
  %v1253 = vld [vmem:[%s6] sm:$0xf]
  %v1254 = vld [vmem:[%s6 + $0x4] sm:$0xf]
  %v1255 = vld [vmem:[%s6 + $0x8] sm:$0xf]
  %v1256 = vld [vmem:[%s6 + $0xc] sm:$0xf]
  %v1257 = vld [vmem:[%s6 + $0x10] sm:$0xf]
  %v1258 = vld [vmem:[%s6 + $0x14] sm:$0xf]
  %v1259 = vld [vmem:[%s6 + $0x18] sm:$0xf]
  %v1260 = vld [vmem:[%s6 + $0x1c] sm:$0xf]
  %v1261 = vld [vmem:[%s6 + $0x20] sm:$0xf]
  %v1262 = vld [vmem:[%s6 + $0x24] sm:$0xf]
  %v1263 = vld [vmem:[%s6 + $0x28] sm:$0xf]
  %v1264 = vld [vmem:[%s6 + $0x2c] sm:$0xf]
  %v1265 = vld [vmem:[%s6 + $0x30] sm:$0xf]
  %v1266 = vld [vmem:[%s6 + $0x34] sm:$0xf]
  %v1267 = vld [vmem:[%s6 + $0x38] sm:$0xf]
  %v1268 = vld [vmem:[%s6 + $0x3c] sm:$0xf]
  %v1269 = vld [vmem:[%s6 + $0x40] sm:$0xf]
  %v1270 = vld [vmem:[%s6 + $0x44] sm:$0xf]
  %v1271 = vld [vmem:[%s6 + $0x48] sm:$0xf]
  %v1272 = vld [vmem:[%s6 + $0x4c] sm:$0xf]
  %v1273 = vld [vmem:[%s6 + $0x50] sm:$0xf]
  %v1274 = vld [vmem:[%s6 + $0x54] sm:$0xf]
  %v1275 = vld [vmem:[%s6 + $0x58] sm:$0xf]
  %v1276 = vld [vmem:[%s6 + $0x5c] sm:$0xf]
  %v1277 = vld [vmem:[%s6 + $0x60] sm:$0xf]
  %v1278 = vld [vmem:[%s6 + $0x64] sm:$0xf]
  %v1279 = vld [vmem:[%s6 + $0x68] sm:$0xf]
  %v1280 = vld [vmem:[%s6 + $0x6c] sm:$0xf]
  %v1281 = vld [vmem:[%s6 + $0x70] sm:$0xf]
  %v1282 = vld [vmem:[%s6 + $0x74] sm:$0xf]
  %v1283 = vld [vmem:[%s6 + $0x78] sm:$0xf]
  %v1284 = vld [vmem:[%s6 + $0x7c] sm:$0xf]
  %v1285 = vld [vmem:[%s7] sm:$0x1]
  %v1287 = vlaneseq
  %v1288 = vshrl.u32 %v1287, 7
  %v1289 = vsub.s32 0, %v1288
  %v1290 = vrot.slane %v1285, %v1289
  %v1324 = vunpack.c.l.b16 %v1253
  %v1325 = vunpack.c.l.b16 %v1254
  %v1326 = vunpack.c.l.b16 %v1255
  %v1327 = vunpack.c.l.b16 %v1256
  %v1328 = vunpack.c.l.b16 %v1257
  %v1329 = vunpack.c.l.b16 %v1258
  %v1330 = vunpack.c.l.b16 %v1259
  %v1331 = vunpack.c.l.b16 %v1260
  %v1332 = vunpack.c.l.b16 %v1261
  %v1333 = vunpack.c.l.b16 %v1262
  %v1334 = vunpack.c.l.b16 %v1263
  %v1335 = vunpack.c.l.b16 %v1264
  %v1336 = vunpack.c.l.b16 %v1265
  %v1337 = vunpack.c.l.b16 %v1266
  %v1338 = vunpack.c.l.b16 %v1267
  %v1339 = vunpack.c.l.b16 %v1268
  %v1340 = vunpack.c.l.b16 %v1269
  %v1341 = vunpack.c.l.b16 %v1270
  %v1342 = vunpack.c.l.b16 %v1271
  %v1343 = vunpack.c.l.b16 %v1272
  %v1344 = vunpack.c.l.b16 %v1273
  %v1345 = vunpack.c.l.b16 %v1274
  %v1346 = vunpack.c.l.b16 %v1275
  %v1347 = vunpack.c.l.b16 %v1276
  %v1348 = vunpack.c.l.b16 %v1277
  %v1349 = vunpack.c.l.b16 %v1278
  %v1350 = vunpack.c.l.b16 %v1279
  %v1351 = vunpack.c.l.b16 %v1280
  %v1352 = vunpack.c.l.b16 %v1281
  %v1353 = vunpack.c.l.b16 %v1282
  %v1354 = vunpack.c.l.b16 %v1283
  %v1355 = vunpack.c.l.b16 %v1284
  %v1356 = vpack.c.b16 %v1325, %v1324
  %v1357 = vpack.c.b16 %v1327, %v1326
  %v1358 = vpack.c.b16 %v1329, %v1328
  %v1359 = vpack.c.b16 %v1331, %v1330
  %v1360 = vpack.c.b16 %v1333, %v1332
  %v1361 = vpack.c.b16 %v1335, %v1334
  %v1362 = vpack.c.b16 %v1337, %v1336
  %v1363 = vpack.c.b16 %v1339, %v1338
  %v1364 = vpack.c.b16 %v1341, %v1340
  %v1365 = vpack.c.b16 %v1343, %v1342
  %v1366 = vpack.c.b16 %v1345, %v1344
  %v1367 = vpack.c.b16 %v1347, %v1346
  %v1368 = vpack.c.b16 %v1349, %v1348
  %v1369 = vpack.c.b16 %v1351, %v1350
  %v1370 = vpack.c.b16 %v1353, %v1352
  %v1371 = vpack.c.b16 %v1355, %v1354
  %1388 = vmatprep.subr.bf16.mxu0 0
  %1389 = vmatpush1.bf16.msra.mxu0 %v1363
  %1390 = vmatprep.subr.bf16.mxu0 0
  %1391 = vmatpush1.bf16.msra.mxu0 %v1362
  %1392 = vmatprep.subr.bf16.mxu0 0
  %1393 = vmatpush1.bf16.msra.mxu0 %v1361
  %1394 = vmatprep.subr.bf16.mxu0 0
  %1395 = vmatpush1.bf16.msra.mxu0 %v1360
  %1396 = vmatprep.subr.bf16.mxu0 0
  %1397 = vmatpush1.bf16.msra.mxu0 %v1359
  %1398 = vmatprep.subr.bf16.mxu0 0
  %1399 = vmatpush1.bf16.msra.mxu0 %v1358
  %1400 = vmatprep.subr.bf16.mxu0 0
  %1401 = vmatpush1.bf16.msra.mxu0 %v1357
  %1402 = vmatprep.subr.bf16.mxu0 0
  %1403 = vmatpush1.bf16.msra.mxu0 %v1356
  %1404 = vmatprep.subr.bf16.mxu0 0
  %1405 = vmatpush2.bf16.msra.mxu0 %v1371
  %1406 = vmatprep.subr.bf16.mxu0 0
  %1407 = vmatpush2.bf16.msra.mxu0 %v1370
  %1408 = vmatprep.subr.bf16.mxu0 0
  %1409 = vmatpush2.bf16.msra.mxu0 %v1369
  %1410 = vmatprep.subr.bf16.mxu0 0
  %1411 = vmatpush2.bf16.msra.mxu0 %v1368
  %1412 = vmatprep.subr.bf16.mxu0 0
  %1413 = vmatpush2.bf16.msra.mxu0 %v1367
  %1414 = vmatprep.subr.bf16.mxu0 0
  %1415 = vmatpush2.bf16.msra.mxu0 %v1366
  %1416 = vmatprep.subr.bf16.mxu0 0
  %1417 = vmatpush2.bf16.msra.mxu0 %v1365
  %1418 = vmatprep.subr.bf16.mxu0 0
  %1419 = vmatpush2.bf16.msra.mxu0 %v1364
  %1420 = vmatprep.mubr.bf16.mxu0 %v1252
  %1421 = vmatmul.mubr.bf16.gmra.mxu0 %v1251
  %v1422 = vpop.f32.mrf.mxu0
  %v1423 = vadd.f32 %v1290, %v1422
  %v1424 = vpop.f32.mrf.mxu0
  %v1425 = vpop.f32.mrf.mxu0
  %v1426 = vpop.f32.mrf.mxu0
  %1427 = vdwg.mxu0
  %v1428 = vmax.f32 %v1423, 0.0
  %v1429 = vpack.c.bf16 %v1428, %v1428
  %v1430 = vld [vmem:[%s8] sm:$0xf]
  %v1431 = vld [vmem:[%s8 + $0x4] sm:$0xf]
  %v1432 = vld [vmem:[%s8 + $0x8] sm:$0xf]
  %v1433 = vld [vmem:[%s8 + $0xc] sm:$0xf]
  %v1434 = vld [vmem:[%s8 + $0x10] sm:$0xf]
  %v1435 = vld [vmem:[%s8 + $0x14] sm:$0xf]
  %v1436 = vld [vmem:[%s8 + $0x18] sm:$0xf]
  %v1437 = vld [vmem:[%s8 + $0x1c] sm:$0xf]
  %v1438 = vld [vmem:[%s8 + $0x20] sm:$0xf]
  %v1439 = vld [vmem:[%s8 + $0x24] sm:$0xf]
  %v1440 = vld [vmem:[%s8 + $0x28] sm:$0xf]
  %v1441 = vld [vmem:[%s8 + $0x2c] sm:$0xf]
  %v1442 = vld [vmem:[%s8 + $0x30] sm:$0xf]
  %v1443 = vld [vmem:[%s8 + $0x34] sm:$0xf]
  %v1444 = vld [vmem:[%s8 + $0x38] sm:$0xf]
  %v1445 = vld [vmem:[%s8 + $0x3c] sm:$0xf]
  %v1446 = vld [vmem:[%s9] sm:$0x1]
  %v1448 = vlaneseq
  %v1449 = vshrl.u32 %v1448, 7
  %v1450 = vsub.s32 0, %v1449
  %v1451 = vrot.slane %v1446, %v1450
  %v1469 = vunpack.c.l.b16 %v1430
  %v1470 = vunpack.c.l.b16 %v1431
  %v1471 = vunpack.c.l.b16 %v1432
  %v1472 = vunpack.c.l.b16 %v1433
  %v1473 = vunpack.c.l.b16 %v1434
  %v1474 = vunpack.c.l.b16 %v1435
  %v1475 = vunpack.c.l.b16 %v1436
  %v1476 = vunpack.c.l.b16 %v1437
  %v1477 = vunpack.c.l.b16 %v1438
  %v1478 = vunpack.c.l.b16 %v1439
  %v1479 = vunpack.c.l.b16 %v1440
  %v1480 = vunpack.c.l.b16 %v1441
  %v1481 = vunpack.c.l.b16 %v1442
  %v1482 = vunpack.c.l.b16 %v1443
  %v1483 = vunpack.c.l.b16 %v1444
  %v1484 = vunpack.c.l.b16 %v1445
  %v1485 = vpack.c.b16 %v1470, %v1469
  %v1486 = vpack.c.b16 %v1472, %v1471
  %v1487 = vpack.c.b16 %v1474, %v1473
  %v1488 = vpack.c.b16 %v1476, %v1475
  %v1489 = vpack.c.b16 %v1478, %v1477
  %v1490 = vpack.c.b16 %v1480, %v1479
  %v1491 = vpack.c.b16 %v1482, %v1481
  %v1492 = vpack.c.b16 %v1484, %v1483
  %1501 = vmatprep.subr.bf16.mxu0 0
  %1502 = vmatpush1.bf16.msra.mxu0 %v1492
  %1503 = vmatprep.subr.bf16.mxu0 0
  %1504 = vmatpush1.bf16.msra.mxu0 %v1491
  %1505 = vmatprep.subr.bf16.mxu0 0
  %1506 = vmatpush1.bf16.msra.mxu0 %v1490
  %1507 = vmatprep.subr.bf16.mxu0 0
  %1508 = vmatpush1.bf16.msra.mxu0 %v1489
  %1509 = vmatprep.subr.bf16.mxu0 0
  %1510 = vmatpush1.bf16.msra.mxu0 %v1488
  %1511 = vmatprep.subr.bf16.mxu0 0
  %1512 = vmatpush1.bf16.msra.mxu0 %v1487
  %1513 = vmatprep.subr.bf16.mxu0 0
  %1514 = vmatpush1.bf16.msra.mxu0 %v1486
  %1515 = vmatprep.subr.bf16.mxu0 0
  %1516 = vmatpush1.bf16.msra.mxu0 %v1485
  %1517 = vmatprep.subr.bf16.mxu0 0
  %1518 = vmatpush2.bf16.msra.mxu0 0
  %1519 = vmatprep.subr.bf16.mxu0 0
  %1520 = vmatpush2.bf16.msra.mxu0 0
  %1521 = vmatprep.subr.bf16.mxu0 0
  %1522 = vmatpush2.bf16.msra.mxu0 0
  %1523 = vmatprep.subr.bf16.mxu0 0
  %1524 = vmatpush2.bf16.msra.mxu0 0
  %1525 = vmatprep.subr.bf16.mxu0 0
  %1526 = vmatpush2.bf16.msra.mxu0 0
  %1527 = vmatprep.subr.bf16.mxu0 0
  %1528 = vmatpush2.bf16.msra.mxu0 0
  %1529 = vmatprep.subr.bf16.mxu0 0
  %1530 = vmatpush2.bf16.msra.mxu0 0
  %1531 = vmatprep.subr.bf16.mxu0 0
  %1532 = vmatpush2.bf16.msra.mxu0 0
  %1533 = vmatprep.mubr.bf16.mxu0 0
  %1534 = vmatmul.mubr.bf16.gmra.mxu0 %v1429
  %v1535 = vpop.f32.mrf.mxu0
  %v1536 = vadd.f32 %v1451, %v1535
  %v1537 = vpop.f32.mrf.mxu0
  %v1538 = vpop.f32.mrf.mxu0
  %v1539 = vpop.f32.mrf.mxu0
  %1540 = vdwg.mxu0
  %1541 = vst [vmem:[%s10] sm:$0xff] %v1536
  // Predicated region
  $region42: #{crop_classification_head.1} parent=0 // pred_check
    _
  $region43: #{crop_classification_head.1} parent=0 // pred_check_branch
    %1543 = sbr.rel (0) target = $region45
  $region44: #{crop_classification_head.1} parent=0 // pred_region
    _
  $region45: #{crop_classification_head.1} parent=0 // pred_fallthru
    _
  // Predicated region
  $region46: #{crop_classification_head.1} parent=0 // pred_check
    _
  $region47: #{crop_classification_head.1} parent=0 // pred_check_branch
    %1545 = sbr.rel (0) target = $region49
  $region48: #{crop_classification_head.1} parent=0 // pred_region
    _
  $region49: #{crop_classification_head.1} parent=0 // pred_fallthru
    _

</llo_original>
